<compile_context>
chip_gen: v5e
topology: v5e:2x2
jax: 0.10.0
libtpu: 0.0.40
codegen_flags: <defaults>
</compile_context>

<pallas_src>
import numpy as np
import jax
import jax.numpy as jnp
from jax.experimental import pallas as pl
from jax.experimental.pallas import tpu as pltpu

# Compat shim: newer JAX exposes pltpu.CompilerParams, older pltpu.TPUCompilerParams.
_CompilerParams = getattr(pltpu, "CompilerParams", None)
if _CompilerParams is None:
    _CompilerParams = pltpu.TPUCompilerParams


def _make_fused_kernel(h, w, cin, mid, off, mm_dtype):
    hw = h * w
    padlen = 2 * off + hw          # [left halo (off) | image (hw) | right halo (off)]
    ext = hw + 2 * w               # plane span covering the +/-1-row vertical shifts

    def make_planes(a_pad, mask_l, mask_r):
        """Three horizontally-resolved tap planes (dx = 0, 1, 2), length `ext`.

        a_pad: (c, padlen) f32 padded activation (halo lanes are zero).
        The 9 conv taps are `planes[dx][:, dy*w : dy*w + hw]`.
        Masks (periodic in the output column, valid for every dy) are applied
        once per plane -> 2 mask multiplies per conv instead of 6.
        """
        base = off - w - 1
        p_l = (a_pad[:, base + 0:base + 0 + ext] * mask_l).astype(mm_dtype)
        p_c = (a_pad[:, base + 1:base + 1 + ext]).astype(mm_dtype)
        p_r = (a_pad[:, base + 2:base + 2 + ext] * mask_r).astype(mm_dtype)
        return (p_l, p_c, p_r)

    def conv_from_planes(planes, w9_ref, shift_ref):
        """9 tap-accumulated matmuls + folded-BN shift + ReLU -> (c_out, hw) f32."""
        c_out = w9_ref.shape[1]
        acc = jnp.zeros((c_out, hw), jnp.float32)
        for dy in range(3):
            for dx in range(3):
                tap = planes[dx][:, dy * w:dy * w + hw]          # (c_in, hw)
                acc = acc + jnp.dot(w9_ref[dy * 3 + dx], tap,
                                    preferred_element_type=jnp.float32)
        return jnp.maximum(acc + shift_ref[...], 0.0)

    def kernel(x_ref, m_ref, ws_ref, ss_ref, wbr_ref, sbr_ref,
               wb22_ref, sb22_ref, o_ref, xp, sp):
        mask_l = m_ref[0:1, :]
        mask_r = m_ref[1:2, :]

        # Zero the halo lanes (128-lane aligned stores).  Done every grid step
        # so a megacore-split grid never sees an uninitialized halo; interior
        # writes below never touch these lanes.
        xp[:, 0:off] = jnp.zeros((cin, off), jnp.float32)
        xp[:, off + hw:padlen] = jnp.zeros((cin, off), jnp.float32)
        sp[:, 0:off] = jnp.zeros((mid, off), jnp.float32)
        sp[:, off + hw:padlen] = jnp.zeros((mid, off), jnp.float32)

        # Input -> padded interior (lane-aligned store at offset `off`).
        xp[:, off:off + hw] = x_ref[0].astype(jnp.float32)

        # stem
        xs = conv_from_planes(make_planes(xp[...], mask_l, mask_r),
                              ws_ref, ss_ref)                    # (mid, hw)
        sp[:, off:off + hw] = xs

        # branch1 + branch2_1 fused: same stem-output planes, weights
        # concatenated along the output-channel axis -> one set of 9 matmuls.
        y = conv_from_planes(make_planes(sp[...], mask_l, mask_r),
                             wbr_ref, sbr_ref)                   # (2*mid, hw)
        # torch.cat(dim=1) first half = branch1 output: direct slice store.
        o_ref[0, 0:mid, :] = y[0:mid, :].astype(o_ref.dtype)
        # branch2_1 output: reuse xp's first `mid` rows as its padded buffer
        # (halo already zero there; saves a third VMEM scratch allocation).
        xp[0:mid, off:off + hw] = y[mid:2 * mid, :]

        # branch2_2 -> second half of the concat.
        x2 = conv_from_planes(make_planes(xp[0:mid, :], mask_l, mask_r),
                              wb22_ref, sb22_ref)                # (mid, hw)
        o_ref[0, mid:2 * mid, :] = x2.astype(o_ref.dtype)

    return kernel


def _fold_weight(wgt, scale, shift, mm_dtype):
    """OIHW conv weight + folded-BN (scale, shift) ->
    ((9, cout, cin) tap matrices in `mm_dtype`, (cout, 1) f32 shift).

    Tap index t = ky*3 + kx matches the kernel's dy*3 + dx ordering."""
    cout, c_in = wgt.shape[0], wgt.shape[1]
    wf = wgt * scale[:, None, None, None]                        # fold BN scale
    w9 = jnp.transpose(wf, (2, 3, 0, 1)).reshape(9, cout, c_in).astype(mm_dtype)
    return w9, shift[:, None].astype(jnp.float32)


def ssh_context_module(x_nchw, params, *, matmul_dtype=jnp.bfloat16):
    """Forward pass matching SSHContextModule.forward (eval-mode BN)."""
    n, cin, h, w = x_nchw.shape
    mid = cin // 2
    hw = h * w
    off = ((w + 1 + 127) // 128) * 128     # lane-aligned halo width (>= w+1)
    padlen = 2 * off + hw
    ext = hw + 2 * w

    w_stem, s_stem = _fold_weight(*params["stem"], matmul_dtype)
    w_b1, s_b1 = _fold_weight(*params["branch1"], matmul_dtype)
    w_b21, s_b21 = _fold_weight(*params["branch2_1"], matmul_dtype)
    w_b22, s_b22 = _fold_weight(*params["branch2_2"], matmul_dtype)
    # branch1 / branch2_1 both consume the stem output: fuse their weights so
    # the kernel runs them as a single conv with 2*mid output channels.
    w_br = jnp.concatenate([w_b1, w_b21], axis=1)                # (9, 2*mid, mid)
    s_br = jnp.concatenate([s_b1, s_b21], axis=0)                # (2*mid, 1)

    # Column-validity masks for the left/right taps over the extended plane:
    # plane index j maps to output column j % w for every vertical shift dy.
    col = np.arange(ext, dtype=np.int64) % w
    masks = jnp.asarray(
        np.stack([col >= 1, col <= w - 2]).astype(np.float32))   # (2, ext)

    x_flat = x_nchw.reshape(n, cin, hw)            # free reshape, lanes = H*W

    mm_bytes = jnp.dtype(matmul_dtype).itemsize
    flops = 2 * 9 * hw * n * (mid * cin + (2 * mid) * mid + mid * mid)
    bytes_accessed = int(
        x_flat.size * x_flat.dtype.itemsize
        + n * 2 * mid * hw * x_nchw.dtype.itemsize
        + (w_stem.size + w_br.size + w_b22.size) * mm_bytes
        + (s_stem.size + s_br.size + s_b22.size) * 4
        + masks.size * 4)
    cost = pl.CostEstimate(flops=int(flops), transcendentals=0,
                           bytes_accessed=bytes_accessed)

    # Working-set estimate -> explicit scoped-VMEM limit (defaults are only
    # 16/32 MiB; production channel counts need the headroom).
    const_vmem = 2 * ((w_stem.size + w_br.size + w_b22.size) * mm_bytes
                      + (s_stem.size + s_br.size + s_b22.size) * 4
                      + masks.size * 4)
    io_vmem = 2 * (cin * hw + 2 * mid * hw) * x_nchw.dtype.itemsize
    scratch_vmem = (cin + mid) * padlen * 4
    tmp_vmem = 3 * cin * ext * (4 + mm_bytes) + 4 * (2 * mid) * hw * 4
    vmem_limit = int(min(64 * 2 ** 20,
                         max(32 * 2 ** 20,
                             4 * (const_vmem + io_vmem + scratch_vmem + tmp_vmem))))

    grid_spec = pltpu.PrefetchScalarGridSpec(
        num_scalar_prefetch=0,
        grid=(n,),
        in_specs=[
            pl.BlockSpec((1, cin, hw), lambda i: (i, 0, 0)),
            # Grid-invariant constants below.
            # TODO(synk): pipeline_mode=pl.Buffered(1) here would reclaim the
            # constant blocks' double-buffers at production channel counts.
            pl.BlockSpec((2, ext), lambda i: (0, 0)),
            pl.BlockSpec((9, mid, cin), lambda i: (0, 0, 0)),
            pl.BlockSpec((mid, 1), lambda i: (0, 0)),
            pl.BlockSpec((9, 2 * mid, mid), lambda i: (0, 0, 0)),
            pl.BlockSpec((2 * mid, 1), lambda i: (0, 0)),
            pl.BlockSpec((9, mid, mid), lambda i: (0, 0, 0)),
            pl.BlockSpec((mid, 1), lambda i: (0, 0)),
        ],
        out_specs=pl.BlockSpec((1, 2 * mid, hw), lambda i: (i, 0, 0)),
        scratch_shapes=[
            pltpu.VMEM((cin, padlen), jnp.float32),   # padded input (reused for branch2_1 out)
            pltpu.VMEM((mid, padlen), jnp.float32),   # padded stem output
        ],
    )

    call_kwargs = dict(
        out_shape=jax.ShapeDtypeStruct((n, 2 * mid, hw), x_nchw.dtype),
        grid_spec=grid_spec,
        compiler_params=_CompilerParams(
            dimension_semantics=("parallel",),        # batch across TCs on v7x
            vmem_limit_bytes=vmem_limit),
    )
    kernel = _make_fused_kernel(h, w, cin, mid, off, matmul_dtype)
    try:
        fn = pl.pallas_call(kernel, cost_estimate=cost, **call_kwargs)
    except TypeError:             # older JAX without the cost_estimate kwarg
        fn = pl.pallas_call(kernel, **call_kwargs)

    out = fn(x_flat, masks, w_stem, s_stem, w_br, s_br, w_b22, s_b22)
    return out.reshape(n, 2 * mid, h, w)             # NCHW, == torch.cat(dim=1)


def make_layer_params(key, cin, cout):
    """Deterministic synthetic Conv3x3BNReLU params; BN folded to scale/shift."""
    kw, kb, kg, kbe, km, kv = jax.random.split(key, 6)
    wgt = 0.1 * jax.random.normal(kw, (cout, cin, 3, 3), jnp.float32)   # OIHW
    b = 0.1 * jax.random.normal(kb, (cout,), jnp.float32)
    gamma = 1.0 + 0.1 * jax.random.normal(kg, (cout,), jnp.float32)
    beta = 0.1 * jax.random.normal(kbe, (cout,), jnp.float32)
    mean = 0.1 * jax.random.normal(km, (cout,), jnp.float32)
    var = 1.0 + 0.1 * jax.random.uniform(kv, (cout,), jnp.float32)
    eps = 1e-5
    scale = gamma / jnp.sqrt(var + eps)
    shift = beta + (b - mean) * scale
    return wgt, scale, shift


# ---------------- pure-JAX reference (for correctness check) ----------------
def _ref_layer(x, wgt, scale, shift):
    y = jax.lax.conv_general_dilated(
        x, wgt, window_strides=(1, 1), padding="SAME",
        dimension_numbers=("NCHW", "OIHW", "NCHW"))
    y = y * scale.reshape(1, -1, 1, 1) + shift.reshape(1, -1, 1, 1)
    return jnp.maximum(y, 0.0)


def ssh_context_module_ref(x_nchw, params):
    xs = _ref_layer(x_nchw, *params["stem"])
    x1 = _ref_layer(xs, *params["branch1"])
    x2 = _ref_layer(xs, *params["branch2_1"])
    x2 = _ref_layer(x2, *params["branch2_2"])
    return jnp.concatenate([x1, x2], axis=1)


if __name__ == "__main__":
    in_channel = 4
    mid = in_channel // 2
    N, H, W = 2, 16, 16

    root = jax.random.PRNGKey(0)
    k_x, k_stem, k_b1, k_b21, k_b22 = jax.random.split(root, 5)

    x = jax.random.normal(k_x, (N, in_channel, H, W), jnp.float32)  # NCHW
    params = {
        "stem": make_layer_params(k_stem, in_channel, mid),
        "branch1": make_layer_params(k_b1, mid, mid),
        "branch2_1": make_layer_params(k_b21, mid, mid),
        "branch2_2": make_layer_params(k_b22, mid, mid),
    }

    ref = jax.block_until_ready(ssh_context_module_ref(x, params))

    # f32 MXU operands: tight check of the fused-kernel math.
    out_f32 = jax.block_until_ready(
        ssh_context_module(x, params, matmul_dtype=jnp.float32))
    assert out_f32.shape == (N, in_channel, H, W), out_f32.shape
    err_f32 = float(jnp.max(jnp.abs(out_f32 - ref)))
    assert err_f32 < 1e-3, err_f32

    # Default bf16 MXU operands (per-target perf guidance), f32 accumulation.
    out_bf16 = jax.block_until_ready(ssh_context_module(x, params))
    assert out_bf16.shape == (N, in_channel, H, W), out_bf16.shape
    err_bf16 = float(jnp.max(jnp.abs(out_bf16 - ref)))
    assert err_bf16 < 1e-1, err_bf16

    print("KERNEL_OK")
</pallas_src>

<mosaic_0001>
module attributes {stable_mosaic.version = 11 : i64} {
  func.func @kernel(%arg0: i32, %arg1: memref<1x4x256xf32, #tpu.memory_space<vmem>>, %arg2: memref<2x288xf32, #tpu.memory_space<vmem>>, %arg3: memref<9x2x4xf32, #tpu.memory_space<vmem>>, %arg4: memref<2x1xf32, #tpu.memory_space<vmem>>, %arg5: memref<9x4x2xf32, #tpu.memory_space<vmem>>, %arg6: memref<4x1xf32, #tpu.memory_space<vmem>>, %arg7: memref<9x2x2xf32, #tpu.memory_space<vmem>>, %arg8: memref<2x1xf32, #tpu.memory_space<vmem>>, %arg9: memref<1x4x256xf32, #tpu.memory_space<vmem>>, %arg10: memref<4x512xf32, #tpu.memory_space<vmem>>, %arg11: memref<2x512xf32, #tpu.memory_space<vmem>>) attributes {dimension_semantics = [#tpu.dimension_semantics<parallel>], iteration_bounds = array<i64: 2>, scalar_prefetch = 0 : i64, scratch_operands = 2 : i64, tpu.core_type = #tpu.core_type<tc>, window_params = [{transform_indices = @transform_0, window_bounds = array<i64: 1, 4, 256>}, {pipeline_mode = #tpu.pipeline_mode<synchronous>, transform_indices = @transform_1, window_bounds = array<i64: 2, 288>}, {pipeline_mode = #tpu.pipeline_mode<synchronous>, transform_indices = @transform_2, window_bounds = array<i64: 9, 2, 4>}, {pipeline_mode = #tpu.pipeline_mode<synchronous>, transform_indices = @transform_3, window_bounds = array<i64: 2, 1>}, {pipeline_mode = #tpu.pipeline_mode<synchronous>, transform_indices = @transform_4, window_bounds = array<i64: 9, 4, 2>}, {pipeline_mode = #tpu.pipeline_mode<synchronous>, transform_indices = @transform_5, window_bounds = array<i64: 4, 1>}, {pipeline_mode = #tpu.pipeline_mode<synchronous>, transform_indices = @transform_6, window_bounds = array<i64: 9, 2, 2>}, {pipeline_mode = #tpu.pipeline_mode<synchronous>, transform_indices = @transform_7, window_bounds = array<i64: 2, 1>}, {transform_indices = @transform_8, window_bounds = array<i64: 1, 4, 256>}]} {
    %c0 = arith.constant 0 : index
    %c0_0 = arith.constant 0 : index
    %0 = vector.load %arg2[%c0, %c0_0] : memref<2x288xf32, #tpu.memory_space<vmem>>, vector<1x288xf32>
    %c1 = arith.constant 1 : index
    %c0_1 = arith.constant 0 : index
    %1 = vector.load %arg2[%c1, %c0_1] : memref<2x288xf32, #tpu.memory_space<vmem>>, vector<1x288xf32>
    %cst = arith.constant 0.000000e+00 : f32
    %2 = vector.broadcast %cst : f32 to vector<4x128xf32>
    %c0_2 = arith.constant 0 : index
    %c0_3 = arith.constant 0 : index
    %3 = vector.load %arg10[%c0_2, %c0_3] : memref<4x512xf32, #tpu.memory_space<vmem>>, vector<4x128xf32>
    tpu.vector_store %arg10[%c0_2, %c0_3], %2 {strides = array<i32>} : memref<4x512xf32, #tpu.memory_space<vmem>>, vector<4x128xf32>,
    %cst_4 = arith.constant 0.000000e+00 : f32
    %4 = vector.broadcast %cst_4 : f32 to vector<4x128xf32>
    %c0_5 = arith.constant 0 : index
    %c384 = arith.constant 384 : index
    %5 = vector.load %arg10[%c0_5, %c384] : memref<4x512xf32, #tpu.memory_space<vmem>>, vector<4x128xf32>
    tpu.vector_store %arg10[%c0_5, %c384], %4 {strides = array<i32>} : memref<4x512xf32, #tpu.memory_space<vmem>>, vector<4x128xf32>,
    %cst_6 = arith.constant 0.000000e+00 : f32
    %6 = vector.broadcast %cst_6 : f32 to vector<2x128xf32>
    %c0_7 = arith.constant 0 : index
    %c0_8 = arith.constant 0 : index
    %7 = vector.load %arg11[%c0_7, %c0_8] : memref<2x512xf32, #tpu.memory_space<vmem>>, vector<2x128xf32>
    tpu.vector_store %arg11[%c0_7, %c0_8], %6 {strides = array<i32>} : memref<2x512xf32, #tpu.memory_space<vmem>>, vector<2x128xf32>,
    %cst_9 = arith.constant 0.000000e+00 : f32
    %8 = vector.broadcast %cst_9 : f32 to vector<2x128xf32>
    %c0_10 = arith.constant 0 : index
    %c384_11 = arith.constant 384 : index
    %9 = vector.load %arg11[%c0_10, %c384_11] : memref<2x512xf32, #tpu.memory_space<vmem>>, vector<2x128xf32>
    tpu.vector_store %arg11[%c0_10, %c384_11], %8 {strides = array<i32>} : memref<2x512xf32, #tpu.memory_space<vmem>>, vector<2x128xf32>,
    %c0_12 = arith.constant 0 : index
    %c0_13 = arith.constant 0 : index
    %c0_14 = arith.constant 0 : index
    %10 = vector.load %arg1[%c0_12, %c0_13, %c0_14] : memref<1x4x256xf32, #tpu.memory_space<vmem>>, vector<1x4x256xf32>
    %11 = vector.shape_cast %10 : vector<1x4x256xf32> to vector<4x256xf32>
    %c0_15 = arith.constant 0 : index
    %c128 = arith.constant 128 : index
    %12 = vector.load %arg10[%c0_15, %c128] : memref<4x512xf32, #tpu.memory_space<vmem>>, vector<4x256xf32>
    tpu.vector_store %arg10[%c0_15, %c128], %11 {strides = array<i32>} : memref<4x512xf32, #tpu.memory_space<vmem>>, vector<4x256xf32>,
    %c0_16 = arith.constant 0 : index
    %c0_17 = arith.constant 0 : index
    %13 = vector.load %arg10[%c0_16, %c0_17] : memref<4x512xf32, #tpu.memory_space<vmem>>, vector<4x512xf32>
    %14 = vector.extract_strided_slice %13 {offsets = [0, 111], sizes = [4, 288], strides = [1, 1]} : vector<4x512xf32> to vector<4x288xf32>
    %15 = vector.broadcast %0 : vector<1x288xf32> to vector<4x288xf32>
    %16 = arith.mulf %14, %15 : vector<4x288xf32>
    %17 = vector.extract_strided_slice %13 {offsets = [0, 112], sizes = [4, 288], strides = [1, 1]} : vector<4x512xf32> to vector<4x288xf32>
    %18 = vector.extract_strided_slice %13 {offsets = [0, 113], sizes = [4, 288], strides = [1, 1]} : vector<4x512xf32> to vector<4x288xf32>
    %19 = vector.broadcast %1 : vector<1x288xf32> to vector<4x288xf32>
    %20 = arith.mulf %18, %19 : vector<4x288xf32>
    %cst_18 = arith.constant 0.000000e+00 : f32
    %21 = vector.broadcast %cst_18 : f32 to vector<2x256xf32>
    %22 = vector.extract_strided_slice %16 {offsets = [0, 0], sizes = [4, 256], strides = [1, 1]} : vector<4x288xf32> to vector<4x256xf32>
    %c0_19 = arith.constant 0 : index
    %c0_20 = arith.constant 0 : index
    %c0_21 = arith.constant 0 : index
    %23 = vector.load %arg3[%c0_19, %c0_20, %c0_21] : memref<9x2x4xf32, #tpu.memory_space<vmem>>, vector<1x2x4xf32>
    %24 = vector.shape_cast %23 : vector<1x2x4xf32> to vector<2x4xf32>
    %cst_22 = arith.constant dense<0.000000e+00> : vector<2x256xf32>
    %25 = tpu.matmul %24, %22, %cst_22 {dimension_numbers = #tpu.dot_dimension_numbers<[1], [0], [0], [1], [0, 0, 1, 1], [], []>} : vector<2x4xf32>, vector<4x256xf32>, vector<2x256xf32> -> vector<2x256xf32>
    %26 = arith.addf %21, %25 : vector<2x256xf32>
    %27 = vector.extract_strided_slice %17 {offsets = [0, 0], sizes = [4, 256], strides = [1, 1]} : vector<4x288xf32> to vector<4x256xf32>
    %c1_23 = arith.constant 1 : index
    %c0_24 = arith.constant 0 : index
    %c0_25 = arith.constant 0 : index
    %28 = vector.load %arg3[%c1_23, %c0_24, %c0_25] : memref<9x2x4xf32, #tpu.memory_space<vmem>>, vector<1x2x4xf32>
    %29 = vector.shape_cast %28 : vector<1x2x4xf32> to vector<2x4xf32>
    %cst_26 = arith.constant dense<0.000000e+00> : vector<2x256xf32>
    %30 = tpu.matmul %29, %27, %cst_26 {dimension_numbers = #tpu.dot_dimension_numbers<[1], [0], [0], [1], [0, 0, 1, 1], [], []>} : vector<2x4xf32>, vector<4x256xf32>, vector<2x256xf32> -> vector<2x256xf32>
    %31 = arith.addf %26, %30 : vector<2x256xf32>
    %32 = vector.extract_strided_slice %20 {offsets = [0, 0], sizes = [4, 256], strides = [1, 1]} : vector<4x288xf32> to vector<4x256xf32>
    %c2 = arith.constant 2 : index
    %c0_27 = arith.constant 0 : index
    %c0_28 = arith.constant 0 : index
    %33 = vector.load %arg3[%c2, %c0_27, %c0_28] : memref<9x2x4xf32, #tpu.memory_space<vmem>>, vector<1x2x4xf32>
    %34 = vector.shape_cast %33 : vector<1x2x4xf32> to vector<2x4xf32>
    %cst_29 = arith.constant dense<0.000000e+00> : vector<2x256xf32>
    %35 = tpu.matmul %34, %32, %cst_29 {dimension_numbers = #tpu.dot_dimension_numbers<[1], [0], [0], [1], [0, 0, 1, 1], [], []>} : vector<2x4xf32>, vector<4x256xf32>, vector<2x256xf32> -> vector<2x256xf32>
    %36 = arith.addf %31, %35 : vector<2x256xf32>
    %37 = vector.extract_strided_slice %16 {offsets = [0, 16], sizes = [4, 256], strides = [1, 1]} : vector<4x288xf32> to vector<4x256xf32>
    %c3 = arith.constant 3 : index
    %c0_30 = arith.constant 0 : index
    %c0_31 = arith.constant 0 : index
    %38 = vector.load %arg3[%c3, %c0_30, %c0_31] : memref<9x2x4xf32, #tpu.memory_space<vmem>>, vector<1x2x4xf32>
    %39 = vector.shape_cast %38 : vector<1x2x4xf32> to vector<2x4xf32>
    %cst_32 = arith.constant dense<0.000000e+00> : vector<2x256xf32>
    %40 = tpu.matmul %39, %37, %cst_32 {dimension_numbers = #tpu.dot_dimension_numbers<[1], [0], [0], [1], [0, 0, 1, 1], [], []>} : vector<2x4xf32>, vector<4x256xf32>, vector<2x256xf32> -> vector<2x256xf32>
    %41 = arith.addf %36, %40 : vector<2x256xf32>
    %42 = vector.extract_strided_slice %17 {offsets = [0, 16], sizes = [4, 256], strides = [1, 1]} : vector<4x288xf32> to vector<4x256xf32>
    %c4 = arith.constant 4 : index
    %c0_33 = arith.constant 0 : index
    %c0_34 = arith.constant 0 : index
    %43 = vector.load %arg3[%c4, %c0_33, %c0_34] : memref<9x2x4xf32, #tpu.memory_space<vmem>>, vector<1x2x4xf32>
    %44 = vector.shape_cast %43 : vector<1x2x4xf32> to vector<2x4xf32>
    %cst_35 = arith.constant dense<0.000000e+00> : vector<2x256xf32>
    %45 = tpu.matmul %44, %42, %cst_35 {dimension_numbers = #tpu.dot_dimension_numbers<[1], [0], [0], [1], [0, 0, 1, 1], [], []>} : vector<2x4xf32>, vector<4x256xf32>, vector<2x256xf32> -> vector<2x256xf32>
    %46 = arith.addf %41, %45 : vector<2x256xf32>
    %47 = vector.extract_strided_slice %20 {offsets = [0, 16], sizes = [4, 256], strides = [1, 1]} : vector<4x288xf32> to vector<4x256xf32>
    %c5 = arith.constant 5 : index
    %c0_36 = arith.constant 0 : index
    %c0_37 = arith.constant 0 : index
    %48 = vector.load %arg3[%c5, %c0_36, %c0_37] : memref<9x2x4xf32, #tpu.memory_space<vmem>>, vector<1x2x4xf32>
    %49 = vector.shape_cast %48 : vector<1x2x4xf32> to vector<2x4xf32>
    %cst_38 = arith.constant dense<0.000000e+00> : vector<2x256xf32>
    %50 = tpu.matmul %49, %47, %cst_38 {dimension_numbers = #tpu.dot_dimension_numbers<[1], [0], [0], [1], [0, 0, 1, 1], [], []>} : vector<2x4xf32>, vector<4x256xf32>, vector<2x256xf32> -> vector<2x256xf32>
    %51 = arith.addf %46, %50 : vector<2x256xf32>
    %52 = vector.extract_strided_slice %16 {offsets = [0, 32], sizes = [4, 256], strides = [1, 1]} : vector<4x288xf32> to vector<4x256xf32>
    %c6 = arith.constant 6 : index
    %c0_39 = arith.constant 0 : index
    %c0_40 = arith.constant 0 : index
    %53 = vector.load %arg3[%c6, %c0_39, %c0_40] : memref<9x2x4xf32, #tpu.memory_space<vmem>>, vector<1x2x4xf32>
    %54 = vector.shape_cast %53 : vector<1x2x4xf32> to vector<2x4xf32>
    %cst_41 = arith.constant dense<0.000000e+00> : vector<2x256xf32>
    %55 = tpu.matmul %54, %52, %cst_41 {dimension_numbers = #tpu.dot_dimension_numbers<[1], [0], [0], [1], [0, 0, 1, 1], [], []>} : vector<2x4xf32>, vector<4x256xf32>, vector<2x256xf32> -> vector<2x256xf32>
    %56 = arith.addf %51, %55 : vector<2x256xf32>
    %57 = vector.extract_strided_slice %17 {offsets = [0, 32], sizes = [4, 256], strides = [1, 1]} : vector<4x288xf32> to vector<4x256xf32>
    %c7 = arith.constant 7 : index
    %c0_42 = arith.constant 0 : index
    %c0_43 = arith.constant 0 : index
    %58 = vector.load %arg3[%c7, %c0_42, %c0_43] : memref<9x2x4xf32, #tpu.memory_space<vmem>>, vector<1x2x4xf32>
    %59 = vector.shape_cast %58 : vector<1x2x4xf32> to vector<2x4xf32>
    %cst_44 = arith.constant dense<0.000000e+00> : vector<2x256xf32>
    %60 = tpu.matmul %59, %57, %cst_44 {dimension_numbers = #tpu.dot_dimension_numbers<[1], [0], [0], [1], [0, 0, 1, 1], [], []>} : vector<2x4xf32>, vector<4x256xf32>, vector<2x256xf32> -> vector<2x256xf32>
    %61 = arith.addf %56, %60 : vector<2x256xf32>
    %62 = vector.extract_strided_slice %20 {offsets = [0, 32], sizes = [4, 256], strides = [1, 1]} : vector<4x288xf32> to vector<4x256xf32>
    %c8 = arith.constant 8 : index
    %c0_45 = arith.constant 0 : index
    %c0_46 = arith.constant 0 : index
    %63 = vector.load %arg3[%c8, %c0_45, %c0_46] : memref<9x2x4xf32, #tpu.memory_space<vmem>>, vector<1x2x4xf32>
    %64 = vector.shape_cast %63 : vector<1x2x4xf32> to vector<2x4xf32>
    %cst_47 = arith.constant dense<0.000000e+00> : vector<2x256xf32>
    %65 = tpu.matmul %64, %62, %cst_47 {dimension_numbers = #tpu.dot_dimension_numbers<[1], [0], [0], [1], [0, 0, 1, 1], [], []>} : vector<2x4xf32>, vector<4x256xf32>, vector<2x256xf32> -> vector<2x256xf32>
    %66 = arith.addf %61, %65 : vector<2x256xf32>
    %c0_48 = arith.constant 0 : index
    %c0_49 = arith.constant 0 : index
    %67 = vector.load %arg4[%c0_48, %c0_49] : memref<2x1xf32, #tpu.memory_space<vmem>>, vector<2x1xf32>
    %68 = vector.broadcast %67 : vector<2x1xf32> to vector<2x256xf32>
    %69 = arith.addf %66, %68 : vector<2x256xf32>
    %cst_50 = arith.constant 0.000000e+00 : f32
    %70 = vector.broadcast %cst_50 : f32 to vector<2x256xf32>
    %71 = arith.maximumf %69, %70 : vector<2x256xf32>
    %c0_51 = arith.constant 0 : index
    %c128_52 = arith.constant 128 : index
    %72 = vector.load %arg11[%c0_51, %c128_52] : memref<2x512xf32, #tpu.memory_space<vmem>>, vector<2x256xf32>
    tpu.vector_store %arg11[%c0_51, %c128_52], %71 {strides = array<i32>} : memref<2x512xf32, #tpu.memory_space<vmem>>, vector<2x256xf32>,
    %c0_53 = arith.constant 0 : index
    %c0_54 = arith.constant 0 : index
    %73 = vector.load %arg11[%c0_53, %c0_54] : memref<2x512xf32, #tpu.memory_space<vmem>>, vector<2x512xf32>
    %74 = vector.extract_strided_slice %73 {offsets = [0, 111], sizes = [2, 288], strides = [1, 1]} : vector<2x512xf32> to vector<2x288xf32>
    %75 = vector.broadcast %0 : vector<1x288xf32> to vector<2x288xf32>
    %76 = arith.mulf %74, %75 : vector<2x288xf32>
    %77 = vector.extract_strided_slice %73 {offsets = [0, 112], sizes = [2, 288], strides = [1, 1]} : vector<2x512xf32> to vector<2x288xf32>
    %78 = vector.extract_strided_slice %73 {offsets = [0, 113], sizes = [2, 288], strides = [1, 1]} : vector<2x512xf32> to vector<2x288xf32>
    %79 = vector.broadcast %1 : vector<1x288xf32> to vector<2x288xf32>
    %80 = arith.mulf %78, %79 : vector<2x288xf32>
    %cst_55 = arith.constant 0.000000e+00 : f32
    %81 = vector.broadcast %cst_55 : f32 to vector<4x256xf32>
    %82 = vector.extract_strided_slice %76 {offsets = [0, 0], sizes = [2, 256], strides = [1, 1]} : vector<2x288xf32> to vector<2x256xf32>
    %c0_56 = arith.constant 0 : index
    %c0_57 = arith.constant 0 : index
    %c0_58 = arith.constant 0 : index
    %83 = vector.load %arg5[%c0_56, %c0_57, %c0_58] : memref<9x4x2xf32, #tpu.memory_space<vmem>>, vector<1x4x2xf32>
    %84 = vector.shape_cast %83 : vector<1x4x2xf32> to vector<4x2xf32>
    %cst_59 = arith.constant dense<0.000000e+00> : vector<4x256xf32>
    %85 = tpu.matmul %84, %82, %cst_59 {dimension_numbers = #tpu.dot_dimension_numbers<[1], [0], [0], [1], [0, 0, 1, 1], [], []>} : vector<4x2xf32>, vector<2x256xf32>, vector<4x256xf32> -> vector<4x256xf32>
    %86 = arith.addf %81, %85 : vector<4x256xf32>
    %87 = vector.extract_strided_slice %77 {offsets = [0, 0], sizes = [2, 256], strides = [1, 1]} : vector<2x288xf32> to vector<2x256xf32>
    %c1_60 = arith.constant 1 : index
    %c0_61 = arith.constant 0 : index
    %c0_62 = arith.constant 0 : index
    %88 = vector.load %arg5[%c1_60, %c0_61, %c0_62] : memref<9x4x2xf32, #tpu.memory_space<vmem>>, vector<1x4x2xf32>
    %89 = vector.shape_cast %88 : vector<1x4x2xf32> to vector<4x2xf32>
    %cst_63 = arith.constant dense<0.000000e+00> : vector<4x256xf32>
    %90 = tpu.matmul %89, %87, %cst_63 {dimension_numbers = #tpu.dot_dimension_numbers<[1], [0], [0], [1], [0, 0, 1, 1], [], []>} : vector<4x2xf32>, vector<2x256xf32>, vector<4x256xf32> -> vector<4x256xf32>
    %91 = arith.addf %86, %90 : vector<4x256xf32>
    %92 = vector.extract_strided_slice %80 {offsets = [0, 0], sizes = [2, 256], strides = [1, 1]} : vector<2x288xf32> to vector<2x256xf32>
    %c2_64 = arith.constant 2 : index
    %c0_65 = arith.constant 0 : index
    %c0_66 = arith.constant 0 : index
    %93 = vector.load %arg5[%c2_64, %c0_65, %c0_66] : memref<9x4x2xf32, #tpu.memory_space<vmem>>, vector<1x4x2xf32>
    %94 = vector.shape_cast %93 : vector<1x4x2xf32> to vector<4x2xf32>
    %cst_67 = arith.constant dense<0.000000e+00> : vector<4x256xf32>
    %95 = tpu.matmul %94, %92, %cst_67 {dimension_numbers = #tpu.dot_dimension_numbers<[1], [0], [0], [1], [0, 0, 1, 1], [], []>} : vector<4x2xf32>, vector<2x256xf32>, vector<4x256xf32> -> vector<4x256xf32>
    %96 = arith.addf %91, %95 : vector<4x256xf32>
    %97 = vector.extract_strided_slice %76 {offsets = [0, 16], sizes = [2, 256], strides = [1, 1]} : vector<2x288xf32> to vector<2x256xf32>
    %c3_68 = arith.constant 3 : index
    %c0_69 = arith.constant 0 : index
    %c0_70 = arith.constant 0 : index
    %98 = vector.load %arg5[%c3_68, %c0_69, %c0_70] : memref<9x4x2xf32, #tpu.memory_space<vmem>>, vector<1x4x2xf32>
    %99 = vector.shape_cast %98 : vector<1x4x2xf32> to vector<4x2xf32>
    %cst_71 = arith.constant dense<0.000000e+00> : vector<4x256xf32>
    %100 = tpu.matmul %99, %97, %cst_71 {dimension_numbers = #tpu.dot_dimension_numbers<[1], [0], [0], [1], [0, 0, 1, 1], [], []>} : vector<4x2xf32>, vector<2x256xf32>, vector<4x256xf32> -> vector<4x256xf32>
    %101 = arith.addf %96, %100 : vector<4x256xf32>
    %102 = vector.extract_strided_slice %77 {offsets = [0, 16], sizes = [2, 256], strides = [1, 1]} : vector<2x288xf32> to vector<2x256xf32>
    %c4_72 = arith.constant 4 : index
    %c0_73 = arith.constant 0 : index
    %c0_74 = arith.constant 0 : index
    %103 = vector.load %arg5[%c4_72, %c0_73, %c0_74] : memref<9x4x2xf32, #tpu.memory_space<vmem>>, vector<1x4x2xf32>
    %104 = vector.shape_cast %103 : vector<1x4x2xf32> to vector<4x2xf32>
    %cst_75 = arith.constant dense<0.000000e+00> : vector<4x256xf32>
    %105 = tpu.matmul %104, %102, %cst_75 {dimension_numbers = #tpu.dot_dimension_numbers<[1], [0], [0], [1], [0, 0, 1, 1], [], []>} : vector<4x2xf32>, vector<2x256xf32>, vector<4x256xf32> -> vector<4x256xf32>
    %106 = arith.addf %101, %105 : vector<4x256xf32>
    %107 = vector.extract_strided_slice %80 {offsets = [0, 16], sizes = [2, 256], strides = [1, 1]} : vector<2x288xf32> to vector<2x256xf32>
    %c5_76 = arith.constant 5 : index
    %c0_77 = arith.constant 0 : index
    %c0_78 = arith.constant 0 : index
    %108 = vector.load %arg5[%c5_76, %c0_77, %c0_78] : memref<9x4x2xf32, #tpu.memory_space<vmem>>, vector<1x4x2xf32>
    %109 = vector.shape_cast %108 : vector<1x4x2xf32> to vector<4x2xf32>
    %cst_79 = arith.constant dense<0.000000e+00> : vector<4x256xf32>
    %110 = tpu.matmul %109, %107, %cst_79 {dimension_numbers = #tpu.dot_dimension_numbers<[1], [0], [0], [1], [0, 0, 1, 1], [], []>} : vector<4x2xf32>, vector<2x256xf32>, vector<4x256xf32> -> vector<4x256xf32>
    %111 = arith.addf %106, %110 : vector<4x256xf32>
    %112 = vector.extract_strided_slice %76 {offsets = [0, 32], sizes = [2, 256], strides = [1, 1]} : vector<2x288xf32> to vector<2x256xf32>
    %c6_80 = arith.constant 6 : index
    %c0_81 = arith.constant 0 : index
    %c0_82 = arith.constant 0 : index
    %113 = vector.load %arg5[%c6_80, %c0_81, %c0_82] : memref<9x4x2xf32, #tpu.memory_space<vmem>>, vector<1x4x2xf32>
    %114 = vector.shape_cast %113 : vector<1x4x2xf32> to vector<4x2xf32>
    %cst_83 = arith.constant dense<0.000000e+00> : vector<4x256xf32>
    %115 = tpu.matmul %114, %112, %cst_83 {dimension_numbers = #tpu.dot_dimension_numbers<[1], [0], [0], [1], [0, 0, 1, 1], [], []>} : vector<4x2xf32>, vector<2x256xf32>, vector<4x256xf32> -> vector<4x256xf32>
    %116 = arith.addf %111, %115 : vector<4x256xf32>
    %117 = vector.extract_strided_slice %77 {offsets = [0, 32], sizes = [2, 256], strides = [1, 1]} : vector<2x288xf32> to vector<2x256xf32>
    %c7_84 = arith.constant 7 : index
    %c0_85 = arith.constant 0 : index
    %c0_86 = arith.constant 0 : index
    %118 = vector.load %arg5[%c7_84, %c0_85, %c0_86] : memref<9x4x2xf32, #tpu.memory_space<vmem>>, vector<1x4x2xf32>
    %119 = vector.shape_cast %118 : vector<1x4x2xf32> to vector<4x2xf32>
    %cst_87 = arith.constant dense<0.000000e+00> : vector<4x256xf32>
    %120 = tpu.matmul %119, %117, %cst_87 {dimension_numbers = #tpu.dot_dimension_numbers<[1], [0], [0], [1], [0, 0, 1, 1], [], []>} : vector<4x2xf32>, vector<2x256xf32>, vector<4x256xf32> -> vector<4x256xf32>
    %121 = arith.addf %116, %120 : vector<4x256xf32>
    %122 = vector.extract_strided_slice %80 {offsets = [0, 32], sizes = [2, 256], strides = [1, 1]} : vector<2x288xf32> to vector<2x256xf32>
    %c8_88 = arith.constant 8 : index
    %c0_89 = arith.constant 0 : index
    %c0_90 = arith.constant 0 : index
    %123 = vector.load %arg5[%c8_88, %c0_89, %c0_90] : memref<9x4x2xf32, #tpu.memory_space<vmem>>, vector<1x4x2xf32>
    %124 = vector.shape_cast %123 : vector<1x4x2xf32> to vector<4x2xf32>
    %cst_91 = arith.constant dense<0.000000e+00> : vector<4x256xf32>
    %125 = tpu.matmul %124, %122, %cst_91 {dimension_numbers = #tpu.dot_dimension_numbers<[1], [0], [0], [1], [0, 0, 1, 1], [], []>} : vector<4x2xf32>, vector<2x256xf32>, vector<4x256xf32> -> vector<4x256xf32>
    %126 = arith.addf %121, %125 : vector<4x256xf32>
    %c0_92 = arith.constant 0 : index
    %c0_93 = arith.constant 0 : index
    %127 = vector.load %arg6[%c0_92, %c0_93] : memref<4x1xf32, #tpu.memory_space<vmem>>, vector<4x1xf32>
    %128 = vector.broadcast %127 : vector<4x1xf32> to vector<4x256xf32>
    %129 = arith.addf %126, %128 : vector<4x256xf32>
    %cst_94 = arith.constant 0.000000e+00 : f32
    %130 = vector.broadcast %cst_94 : f32 to vector<4x256xf32>
    %131 = arith.maximumf %129, %130 : vector<4x256xf32>
    %132 = vector.extract_strided_slice %131 {offsets = [0, 0], sizes = [2, 256], strides = [1, 1]} : vector<4x256xf32> to vector<2x256xf32>
    %c0_95 = arith.constant 0 : index
    %c0_96 = arith.constant 0 : index
    %c0_97 = arith.constant 0 : index
    %133 = vector.load %arg9[%c0_95, %c0_96, %c0_97] : memref<1x4x256xf32, #tpu.memory_space<vmem>>, vector<1x2x256xf32>
    %134 = vector.shape_cast %133 : vector<1x2x256xf32> to vector<2x256xf32>
    %135 = vector.shape_cast %132 : vector<2x256xf32> to vector<1x2x256xf32>
    tpu.vector_store %arg9[%c0_95, %c0_96, %c0_97], %135 {strides = array<i32>} : memref<1x4x256xf32, #tpu.memory_space<vmem>>, vector<1x2x256xf32>,
    %136 = vector.extract_strided_slice %131 {offsets = [2, 0], sizes = [2, 256], strides = [1, 1]} : vector<4x256xf32> to vector<2x256xf32>
    %c0_98 = arith.constant 0 : index
    %c128_99 = arith.constant 128 : index
    %137 = vector.load %arg10[%c0_98, %c128_99] : memref<4x512xf32, #tpu.memory_space<vmem>>, vector<2x256xf32>
    tpu.vector_store %arg10[%c0_98, %c128_99], %136 {strides = array<i32>} : memref<4x512xf32, #tpu.memory_space<vmem>>, vector<2x256xf32>,
    %c0_100 = arith.constant 0 : index
    %c0_101 = arith.constant 0 : index
    %138 = vector.load %arg10[%c0_100, %c0_101] : memref<4x512xf32, #tpu.memory_space<vmem>>, vector<2x512xf32>
    %139 = vector.extract_strided_slice %138 {offsets = [0, 111], sizes = [2, 288], strides = [1, 1]} : vector<2x512xf32> to vector<2x288xf32>
    %140 = vector.broadcast %0 : vector<1x288xf32> to vector<2x288xf32>
    %141 = arith.mulf %139, %140 : vector<2x288xf32>
    %142 = vector.extract_strided_slice %138 {offsets = [0, 112], sizes = [2, 288], strides = [1, 1]} : vector<2x512xf32> to vector<2x288xf32>
    %143 = vector.extract_strided_slice %138 {offsets = [0, 113], sizes = [2, 288], strides = [1, 1]} : vector<2x512xf32> to vector<2x288xf32>
    %144 = vector.broadcast %1 : vector<1x288xf32> to vector<2x288xf32>
    %145 = arith.mulf %143, %144 : vector<2x288xf32>
    %cst_102 = arith.constant 0.000000e+00 : f32
    %146 = vector.broadcast %cst_102 : f32 to vector<2x256xf32>
    %147 = vector.extract_strided_slice %141 {offsets = [0, 0], sizes = [2, 256], strides = [1, 1]} : vector<2x288xf32> to vector<2x256xf32>
    %c0_103 = arith.constant 0 : index
    %c0_104 = arith.constant 0 : index
    %c0_105 = arith.constant 0 : index
    %148 = vector.load %arg7[%c0_103, %c0_104, %c0_105] : memref<9x2x2xf32, #tpu.memory_space<vmem>>, vector<1x2x2xf32>
    %149 = vector.shape_cast %148 : vector<1x2x2xf32> to vector<2x2xf32>
    %cst_106 = arith.constant dense<0.000000e+00> : vector<2x256xf32>
    %150 = tpu.matmul %149, %147, %cst_106 {dimension_numbers = #tpu.dot_dimension_numbers<[1], [0], [0], [1], [0, 0, 1, 1], [], []>} : vector<2x2xf32>, vector<2x256xf32>, vector<2x256xf32> -> vector<2x256xf32>
    %151 = arith.addf %146, %150 : vector<2x256xf32>
    %152 = vector.extract_strided_slice %142 {offsets = [0, 0], sizes = [2, 256], strides = [1, 1]} : vector<2x288xf32> to vector<2x256xf32>
    %c1_107 = arith.constant 1 : index
    %c0_108 = arith.constant 0 : index
    %c0_109 = arith.constant 0 : index
    %153 = vector.load %arg7[%c1_107, %c0_108, %c0_109] : memref<9x2x2xf32, #tpu.memory_space<vmem>>, vector<1x2x2xf32>
    %154 = vector.shape_cast %153 : vector<1x2x2xf32> to vector<2x2xf32>
    %cst_110 = arith.constant dense<0.000000e+00> : vector<2x256xf32>
    %155 = tpu.matmul %154, %152, %cst_110 {dimension_numbers = #tpu.dot_dimension_numbers<[1], [0], [0], [1], [0, 0, 1, 1], [], []>} : vector<2x2xf32>, vector<2x256xf32>, vector<2x256xf32> -> vector<2x256xf32>
    %156 = arith.addf %151, %155 : vector<2x256xf32>
    %157 = vector.extract_strided_slice %145 {offsets = [0, 0], sizes = [2, 256], strides = [1, 1]} : vector<2x288xf32> to vector<2x256xf32>
    %c2_111 = arith.constant 2 : index
    %c0_112 = arith.constant 0 : index
    %c0_113 = arith.constant 0 : index
    %158 = vector.load %arg7[%c2_111, %c0_112, %c0_113] : memref<9x2x2xf32, #tpu.memory_space<vmem>>, vector<1x2x2xf32>
    %159 = vector.shape_cast %158 : vector<1x2x2xf32> to vector<2x2xf32>
    %cst_114 = arith.constant dense<0.000000e+00> : vector<2x256xf32>
    %160 = tpu.matmul %159, %157, %cst_114 {dimension_numbers = #tpu.dot_dimension_numbers<[1], [0], [0], [1], [0, 0, 1, 1], [], []>} : vector<2x2xf32>, vector<2x256xf32>, vector<2x256xf32> -> vector<2x256xf32>
    %161 = arith.addf %156, %160 : vector<2x256xf32>
    %162 = vector.extract_strided_slice %141 {offsets = [0, 16], sizes = [2, 256], strides = [1, 1]} : vector<2x288xf32> to vector<2x256xf32>
    %c3_115 = arith.constant 3 : index
    %c0_116 = arith.constant 0 : index
    %c0_117 = arith.constant 0 : index
    %163 = vector.load %arg7[%c3_115, %c0_116, %c0_117] : memref<9x2x2xf32, #tpu.memory_space<vmem>>, vector<1x2x2xf32>
    %164 = vector.shape_cast %163 : vector<1x2x2xf32> to vector<2x2xf32>
    %cst_118 = arith.constant dense<0.000000e+00> : vector<2x256xf32>
    %165 = tpu.matmul %164, %162, %cst_118 {dimension_numbers = #tpu.dot_dimension_numbers<[1], [0], [0], [1], [0, 0, 1, 1], [], []>} : vector<2x2xf32>, vector<2x256xf32>, vector<2x256xf32> -> vector<2x256xf32>
    %166 = arith.addf %161, %165 : vector<2x256xf32>
    %167 = vector.extract_strided_slice %142 {offsets = [0, 16], sizes = [2, 256], strides = [1, 1]} : vector<2x288xf32> to vector<2x256xf32>
    %c4_119 = arith.constant 4 : index
    %c0_120 = arith.constant 0 : index
    %c0_121 = arith.constant 0 : index
    %168 = vector.load %arg7[%c4_119, %c0_120, %c0_121] : memref<9x2x2xf32, #tpu.memory_space<vmem>>, vector<1x2x2xf32>
    %169 = vector.shape_cast %168 : vector<1x2x2xf32> to vector<2x2xf32>
    %cst_122 = arith.constant dense<0.000000e+00> : vector<2x256xf32>
    %170 = tpu.matmul %169, %167, %cst_122 {dimension_numbers = #tpu.dot_dimension_numbers<[1], [0], [0], [1], [0, 0, 1, 1], [], []>} : vector<2x2xf32>, vector<2x256xf32>, vector<2x256xf32> -> vector<2x256xf32>
    %171 = arith.addf %166, %170 : vector<2x256xf32>
    %172 = vector.extract_strided_slice %145 {offsets = [0, 16], sizes = [2, 256], strides = [1, 1]} : vector<2x288xf32> to vector<2x256xf32>
    %c5_123 = arith.constant 5 : index
    %c0_124 = arith.constant 0 : index
    %c0_125 = arith.constant 0 : index
    %173 = vector.load %arg7[%c5_123, %c0_124, %c0_125] : memref<9x2x2xf32, #tpu.memory_space<vmem>>, vector<1x2x2xf32>
    %174 = vector.shape_cast %173 : vector<1x2x2xf32> to vector<2x2xf32>
    %cst_126 = arith.constant dense<0.000000e+00> : vector<2x256xf32>
    %175 = tpu.matmul %174, %172, %cst_126 {dimension_numbers = #tpu.dot_dimension_numbers<[1], [0], [0], [1], [0, 0, 1, 1], [], []>} : vector<2x2xf32>, vector<2x256xf32>, vector<2x256xf32> -> vector<2x256xf32>
    %176 = arith.addf %171, %175 : vector<2x256xf32>
    %177 = vector.extract_strided_slice %141 {offsets = [0, 32], sizes = [2, 256], strides = [1, 1]} : vector<2x288xf32> to vector<2x256xf32>
    %c6_127 = arith.constant 6 : index
    %c0_128 = arith.constant 0 : index
    %c0_129 = arith.constant 0 : index
    %178 = vector.load %arg7[%c6_127, %c0_128, %c0_129] : memref<9x2x2xf32, #tpu.memory_space<vmem>>, vector<1x2x2xf32>
    %179 = vector.shape_cast %178 : vector<1x2x2xf32> to vector<2x2xf32>
    %cst_130 = arith.constant dense<0.000000e+00> : vector<2x256xf32>
    %180 = tpu.matmul %179, %177, %cst_130 {dimension_numbers = #tpu.dot_dimension_numbers<[1], [0], [0], [1], [0, 0, 1, 1], [], []>} : vector<2x2xf32>, vector<2x256xf32>, vector<2x256xf32> -> vector<2x256xf32>
    %181 = arith.addf %176, %180 : vector<2x256xf32>
    %182 = vector.extract_strided_slice %142 {offsets = [0, 32], sizes = [2, 256], strides = [1, 1]} : vector<2x288xf32> to vector<2x256xf32>
    %c7_131 = arith.constant 7 : index
    %c0_132 = arith.constant 0 : index
    %c0_133 = arith.constant 0 : index
    %183 = vector.load %arg7[%c7_131, %c0_132, %c0_133] : memref<9x2x2xf32, #tpu.memory_space<vmem>>, vector<1x2x2xf32>
    %184 = vector.shape_cast %183 : vector<1x2x2xf32> to vector<2x2xf32>
    %cst_134 = arith.constant dense<0.000000e+00> : vector<2x256xf32>
    %185 = tpu.matmul %184, %182, %cst_134 {dimension_numbers = #tpu.dot_dimension_numbers<[1], [0], [0], [1], [0, 0, 1, 1], [], []>} : vector<2x2xf32>, vector<2x256xf32>, vector<2x256xf32> -> vector<2x256xf32>
    %186 = arith.addf %181, %185 : vector<2x256xf32>
    %187 = vector.extract_strided_slice %145 {offsets = [0, 32], sizes = [2, 256], strides = [1, 1]} : vector<2x288xf32> to vector<2x256xf32>
    %c8_135 = arith.constant 8 : index
    %c0_136 = arith.constant 0 : index
    %c0_137 = arith.constant 0 : index
    %188 = vector.load %arg7[%c8_135, %c0_136, %c0_137] : memref<9x2x2xf32, #tpu.memory_space<vmem>>, vector<1x2x2xf32>
    %189 = vector.shape_cast %188 : vector<1x2x2xf32> to vector<2x2xf32>
    %cst_138 = arith.constant dense<0.000000e+00> : vector<2x256xf32>
    %190 = tpu.matmul %189, %187, %cst_138 {dimension_numbers = #tpu.dot_dimension_numbers<[1], [0], [0], [1], [0, 0, 1, 1], [], []>} : vector<2x2xf32>, vector<2x256xf32>, vector<2x256xf32> -> vector<2x256xf32>
    %191 = arith.addf %186, %190 : vector<2x256xf32>
    %c0_139 = arith.constant 0 : index
    %c0_140 = arith.constant 0 : index
    %192 = vector.load %arg8[%c0_139, %c0_140] : memref<2x1xf32, #tpu.memory_space<vmem>>, vector<2x1xf32>
    %193 = vector.broadcast %192 : vector<2x1xf32> to vector<2x256xf32>
    %194 = arith.addf %191, %193 : vector<2x256xf32>
    %cst_141 = arith.constant 0.000000e+00 : f32
    %195 = vector.broadcast %cst_141 : f32 to vector<2x256xf32>
    %196 = arith.maximumf %194, %195 : vector<2x256xf32>
    %c0_142 = arith.constant 0 : index
    %c2_143 = arith.constant 2 : index
    %c0_144 = arith.constant 0 : index
    %197 = vector.load %arg9[%c0_142, %c2_143, %c0_144] : memref<1x4x256xf32, #tpu.memory_space<vmem>>, vector<1x2x256xf32>
    %198 = vector.shape_cast %197 : vector<1x2x256xf32> to vector<2x256xf32>
    %199 = vector.shape_cast %196 : vector<2x256xf32> to vector<1x2x256xf32>
    tpu.vector_store %arg9[%c0_142, %c2_143, %c0_144], %199 {strides = array<i32>} : memref<1x4x256xf32, #tpu.memory_space<vmem>>, vector<1x2x256xf32>,
    return
  }
  func.func @transform_0(%arg0: i32) -> (i32, i32, i32) {
    %c0_i32 = arith.constant 0 : i32
    %c0_i32_0 = arith.constant 0 : i32
    %c0_i32_1 = arith.constant 0 : i32
    return %arg0, %c0_i32, %c0_i32_0 : i32, i32, i32
  }
  func.func @transform_1(%arg0: i32) -> (i32, i32) {
    %c0_i32 = arith.constant 0 : i32
    %c0_i32_0 = arith.constant 0 : i32
    %c0_i32_1 = arith.constant 0 : i32
    return %c0_i32, %c0_i32_0 : i32, i32
  }
  func.func @transform_2(%arg0: i32) -> (i32, i32, i32) {
    %c0_i32 = arith.constant 0 : i32
    %c0_i32_0 = arith.constant 0 : i32
    %c0_i32_1 = arith.constant 0 : i32
    %c0_i32_2 = arith.constant 0 : i32
    return %c0_i32, %c0_i32_0, %c0_i32_1 : i32, i32, i32
  }
  func.func @transform_3(%arg0: i32) -> (i32, i32) {
    %c0_i32 = arith.constant 0 : i32
    %c0_i32_0 = arith.constant 0 : i32
    %c0_i32_1 = arith.constant 0 : i32
    return %c0_i32, %c0_i32_0 : i32, i32
  }
  func.func @transform_4(%arg0: i32) -> (i32, i32, i32) {
    %c0_i32 = arith.constant 0 : i32
    %c0_i32_0 = arith.constant 0 : i32
    %c0_i32_1 = arith.constant 0 : i32
    %c0_i32_2 = arith.constant 0 : i32
    return %c0_i32, %c0_i32_0, %c0_i32_1 : i32, i32, i32
  }
  func.func @transform_5(%arg0: i32) -> (i32, i32) {
    %c0_i32 = arith.constant 0 : i32
    %c0_i32_0 = arith.constant 0 : i32
    %c0_i32_1 = arith.constant 0 : i32
    return %c0_i32, %c0_i32_0 : i32, i32
  }
  func.func @transform_6(%arg0: i32) -> (i32, i32, i32) {
    %c0_i32 = arith.constant 0 : i32
    %c0_i32_0 = arith.constant 0 : i32
    %c0_i32_1 = arith.constant 0 : i32
    %c0_i32_2 = arith.constant 0 : i32
    return %c0_i32, %c0_i32_0, %c0_i32_1 : i32, i32, i32
  }
  func.func @transform_7(%arg0: i32) -> (i32, i32) {
    %c0_i32 = arith.constant 0 : i32
    %c0_i32_0 = arith.constant 0 : i32
    %c0_i32_1 = arith.constant 0 : i32
    return %c0_i32, %c0_i32_0 : i32, i32
  }
  func.func @transform_8(%arg0: i32) -> (i32, i32, i32) {
    %c0_i32 = arith.constant 0 : i32
    %c0_i32_0 = arith.constant 0 : i32
    %c0_i32_1 = arith.constant 0 : i32
    return %arg0, %c0_i32, %c0_i32_0 : i32, i32, i32
  }
}

</mosaic_0001>

<llo_original>
// kernel: tpu_custom_call.1
$region0: #{tpu_custom_call.1}
  #allocation0 [shape = 'u32[]', space=smem, size = 0x4, offset = 0x4, fixed_abs, tag = 'smem constant byte address 0x4 - core index']
  #allocation1 [shape = 'u32[72,128]{1,0:T(1,128)}', space=vmem, size = 0x9000, scoped, tag = 'internal scratch']
  #allocation2 [shape = 'f32[4,512]{1,0:T(4,128)}', space=vmem, size = 0x2000, scoped, tag = 'scratch operand']
  #allocation3 [shape = 'f32[2,512]{1,0:T(2,128)}', space=vmem, size = 0x1000, scoped, tag = 'scratch operand']
  %s0 = inlined_call_operand.vmem [shape: f32[2,4,256], index: 0, kind: input, shape index: {}]
  %s1 = inlined_call_operand.vmem [shape: f32[2,288], index: 1, kind: input, shape index: {}]
  %s2 = inlined_call_operand.vmem [shape: f32[9,2,4], index: 2, kind: input, shape index: {}]
  %s3 = inlined_call_operand.vmem [shape: f32[2,1], index: 3, kind: input, shape index: {}]
  %s4 = inlined_call_operand.vmem [shape: f32[9,4,2], index: 4, kind: input, shape index: {}]
  %s5 = inlined_call_operand.vmem [shape: f32[4,1], index: 5, kind: input, shape index: {}]
  %s6 = inlined_call_operand.vmem [shape: f32[9,2,2], index: 6, kind: input, shape index: {}]
  %s7 = inlined_call_operand.vmem [shape: f32[2,1], index: 7, kind: input, shape index: {}]
  %s8 = inlined_call_operand.hbm [shape: f32[2,4,256], index: 8, kind: output, shape index: {}]
  %s9 = sld [smem:[#allocation0]]
  $region65: #{tpu_custom_call.1} parent=0
    _
  %s11 = ssub.s32 1, %s9
  %s12 = scalar_select 0, %s11, %s9
  $region1: #{tpu_custom_call.1} parent=0
    #allocation4 [shape = 'u8[8192]{0}', space=vmem, size = 0x2000, scoped, tag = 'output window, operand 0']
    #allocation5 [shape = 's32[2]{0}', space=sflag, size = 0x8, scoped, tag = 'scoped memory for tpu_custom_call.1']
    %13 = vsyncpa [#allocation5], 0
    %s14 = scalar_lea.sflag [#allocation5], 1
    %15 = vsyncpa %s14, 0
    loop: start=0, step=1, limit=4
    $region2: #{tpu_custom_call.1} parent=1 // loop_pre_header
      _
    $region3: #{tpu_custom_call.1} parent=1 // loop_header
      %s17 = sphi 0, %s21
      %p18 = scmp.ge.s32.totalorder %s17, 4
      %s27 = sphi 0, %s29
      %s30 = sphi 0, %s27
      %s31 = sphi 0, %s30
      %s47 = sphi 0, %s31
      %s51 = sphi 0, %s51
      %s53 = sphi 0, %s51
      %s54 = sphi 0, %s53
      %s68 = sphi 0, %s54
      %s72 = sphi 0, %s72
      %s74 = sphi 0, %s72
      %s75 = sphi 0, %s74
      %s89 = sphi 0, %s75
      %s93 = sphi 0, %s93
      %s95 = sphi 0, %s93
      %s96 = sphi 0, %s95
      %s110 = sphi 0, %s96
      %s114 = sphi 0, %s114
      %s116 = sphi 0, %s114
      %s117 = sphi 0, %s116
      %s131 = sphi 0, %s117
      %s135 = sphi 0, %s135
      %s137 = sphi 0, %s135
      %s138 = sphi 0, %s137
      %s152 = sphi 0, %s138
      %s156 = sphi 0, %s156
      %s158 = sphi 0, %s156
      %s159 = sphi 0, %s158
      %s173 = sphi 0, %s159
      %s177 = sphi 0, %s177
      %s179 = sphi 0, %s177
      %s180 = sphi 0, %s179
      %s194 = sphi 0, %s180
      %s200 = sphi 0, %s202
      %s203 = sphi 0, %s200
      %s204 = sphi 0, %s203
      %s220 = sphi 0, %s204
    $region4: #{tpu_custom_call.1} parent=1 // loop_header_branch
      %20 = sbr.rel (%p18) target = $region8
    $region5: #{tpu_custom_call.1} parent=1 // loop_body
      %s22 = ssub.s32 %s17, 1
      %s23 = ssub.s32 %s17, 2
      %s24 = sadd.s32 %s17, 1
      %s25 = ssub.s32 %s17, %s24
      %p26 = scmp.eq.s32.totalorder %s25, 0
      %s28 = sadd.s32 %s27, 1
      %s29 = scalar_select %p26, %s27, %s28
      %p32 = pneg %p26
      %p33 = scmp.eq.s32.totalorder %s17, 1
      %p34 = por %p32, %p33
      %p35 = scmp.ne.s32.totalorder %s27, %s30
      %p36 = scmp.eq.s32.totalorder %s17, 0
      %p37 = por %p35, %p36
      %p38 = scmp.ne.s32.totalorder %s27, %s30
      %p39 = scmp.eq.s32.totalorder %s22, 1
      %p40 = por %p38, %p39
      %p41 = scmp.ne.s32.totalorder %s30, %s31
      %p42 = scmp.eq.s32.totalorder %s22, 0
      %p43 = por %p41, %p42
      %p44 = scmp.ne.s32.totalorder %s30, %s31
      %p45 = scmp.eq.s32.totalorder %s23, 1
      %p46 = por %p44, %p45
      %p48 = scmp.ne.s32.totalorder %s31, %s47
      %p49 = scmp.eq.s32.totalorder %s23, 0
      %p50 = por %p48, %p49
      %s52 = sadd.s32 %s51, 1
      %p55 = scmp.eq.s32.totalorder %s17, 1
      %p56 = scmp.ne.s32.totalorder %s51, %s53
      %p57 = scmp.eq.s32.totalorder %s17, 0
      %p58 = por %p56, %p57
      %p59 = scmp.ne.s32.totalorder %s51, %s53
      %p60 = scmp.eq.s32.totalorder %s22, 1
      %p61 = por %p59, %p60
      %p62 = scmp.ne.s32.totalorder %s53, %s54
      %p63 = scmp.eq.s32.totalorder %s22, 0
      %p64 = por %p62, %p63
      %p65 = scmp.ne.s32.totalorder %s53, %s54
      %p66 = scmp.eq.s32.totalorder %s23, 1
      %p67 = por %p65, %p66
      %p69 = scmp.ne.s32.totalorder %s54, %s68
      %p70 = scmp.eq.s32.totalorder %s23, 0
      %p71 = por %p69, %p70
      %s73 = sadd.s32 %s72, 1
      %p76 = scmp.eq.s32.totalorder %s17, 1
      %p77 = scmp.ne.s32.totalorder %s72, %s74
      %p78 = scmp.eq.s32.totalorder %s17, 0
      %p79 = por %p77, %p78
      %p80 = scmp.ne.s32.totalorder %s72, %s74
      %p81 = scmp.eq.s32.totalorder %s22, 1
      %p82 = por %p80, %p81
      %p83 = scmp.ne.s32.totalorder %s74, %s75
      %p84 = scmp.eq.s32.totalorder %s22, 0
      %p85 = por %p83, %p84
      %p86 = scmp.ne.s32.totalorder %s74, %s75
      %p87 = scmp.eq.s32.totalorder %s23, 1
      %p88 = por %p86, %p87
      %p90 = scmp.ne.s32.totalorder %s75, %s89
      %p91 = scmp.eq.s32.totalorder %s23, 0
      %p92 = por %p90, %p91
      %s94 = sadd.s32 %s93, 1
      %p97 = scmp.eq.s32.totalorder %s17, 1
      %p98 = scmp.ne.s32.totalorder %s93, %s95
      %p99 = scmp.eq.s32.totalorder %s17, 0
      %p100 = por %p98, %p99
      %p101 = scmp.ne.s32.totalorder %s93, %s95
      %p102 = scmp.eq.s32.totalorder %s22, 1
      %p103 = por %p101, %p102
      %p104 = scmp.ne.s32.totalorder %s95, %s96
      %p105 = scmp.eq.s32.totalorder %s22, 0
      %p106 = por %p104, %p105
      %p107 = scmp.ne.s32.totalorder %s95, %s96
      %p108 = scmp.eq.s32.totalorder %s23, 1
      %p109 = por %p107, %p108
      %p111 = scmp.ne.s32.totalorder %s96, %s110
      %p112 = scmp.eq.s32.totalorder %s23, 0
      %p113 = por %p111, %p112
      %s115 = sadd.s32 %s114, 1
      %p118 = scmp.eq.s32.totalorder %s17, 1
      %p119 = scmp.ne.s32.totalorder %s114, %s116
      %p120 = scmp.eq.s32.totalorder %s17, 0
      %p121 = por %p119, %p120
      %p122 = scmp.ne.s32.totalorder %s114, %s116
      %p123 = scmp.eq.s32.totalorder %s22, 1
      %p124 = por %p122, %p123
      %p125 = scmp.ne.s32.totalorder %s116, %s117
      %p126 = scmp.eq.s32.totalorder %s22, 0
      %p127 = por %p125, %p126
      %p128 = scmp.ne.s32.totalorder %s116, %s117
      %p129 = scmp.eq.s32.totalorder %s23, 1
      %p130 = por %p128, %p129
      %p132 = scmp.ne.s32.totalorder %s117, %s131
      %p133 = scmp.eq.s32.totalorder %s23, 0
      %p134 = por %p132, %p133
      %s136 = sadd.s32 %s135, 1
      %p139 = scmp.eq.s32.totalorder %s17, 1
      %p140 = scmp.ne.s32.totalorder %s135, %s137
      %p141 = scmp.eq.s32.totalorder %s17, 0
      %p142 = por %p140, %p141
      %p143 = scmp.ne.s32.totalorder %s135, %s137
      %p144 = scmp.eq.s32.totalorder %s22, 1
      %p145 = por %p143, %p144
      %p146 = scmp.ne.s32.totalorder %s137, %s138
      %p147 = scmp.eq.s32.totalorder %s22, 0
      %p148 = por %p146, %p147
      %p149 = scmp.ne.s32.totalorder %s137, %s138
      %p150 = scmp.eq.s32.totalorder %s23, 1
      %p151 = por %p149, %p150
      %p153 = scmp.ne.s32.totalorder %s138, %s152
      %p154 = scmp.eq.s32.totalorder %s23, 0
      %p155 = por %p153, %p154
      %s157 = sadd.s32 %s156, 1
      %p160 = scmp.eq.s32.totalorder %s17, 1
      %p161 = scmp.ne.s32.totalorder %s156, %s158
      %p162 = scmp.eq.s32.totalorder %s17, 0
      %p163 = por %p161, %p162
      %p164 = scmp.ne.s32.totalorder %s156, %s158
      %p165 = scmp.eq.s32.totalorder %s22, 1
      %p166 = por %p164, %p165
      %p167 = scmp.ne.s32.totalorder %s158, %s159
      %p168 = scmp.eq.s32.totalorder %s22, 0
      %p169 = por %p167, %p168
      %p170 = scmp.ne.s32.totalorder %s158, %s159
      %p171 = scmp.eq.s32.totalorder %s23, 1
      %p172 = por %p170, %p171
      %p174 = scmp.ne.s32.totalorder %s159, %s173
      %p175 = scmp.eq.s32.totalorder %s23, 0
      %p176 = por %p174, %p175
      %s178 = sadd.s32 %s177, 1
      %p181 = scmp.eq.s32.totalorder %s17, 1
      %p182 = scmp.ne.s32.totalorder %s177, %s179
      %p183 = scmp.eq.s32.totalorder %s17, 0
      %p184 = por %p182, %p183
      %p185 = scmp.ne.s32.totalorder %s177, %s179
      %p186 = scmp.eq.s32.totalorder %s22, 1
      %p187 = por %p185, %p186
      %p188 = scmp.ne.s32.totalorder %s179, %s180
      %p189 = scmp.eq.s32.totalorder %s22, 0
      %p190 = por %p188, %p189
      %p191 = scmp.ne.s32.totalorder %s179, %s180
      %p192 = scmp.eq.s32.totalorder %s23, 1
      %p193 = por %p191, %p192
      %p195 = scmp.ne.s32.totalorder %s180, %s194
      %p196 = scmp.eq.s32.totalorder %s23, 0
      %p197 = por %p195, %p196
      %s198 = ssub.s32 %s17, %s24
      %p199 = scmp.eq.s32.totalorder %s198, 0
      %s201 = sadd.s32 %s200, 1
      %s202 = scalar_select %p199, %s200, %s201
      %p205 = pneg %p199
      %p206 = scmp.eq.s32.totalorder %s17, 1
      %p207 = por %p205, %p206
      %p208 = scmp.ne.s32.totalorder %s200, %s203
      %p209 = scmp.eq.s32.totalorder %s17, 0
      %p210 = por %p208, %p209
      %p211 = scmp.ne.s32.totalorder %s200, %s203
      %p212 = scmp.eq.s32.totalorder %s22, 1
      %p213 = por %p211, %p212
      %p214 = scmp.ne.s32.totalorder %s203, %s204
      %p215 = scmp.eq.s32.totalorder %s22, 0
      %p216 = por %p214, %p215
      %p217 = scmp.ne.s32.totalorder %s203, %s204
      %p218 = scmp.eq.s32.totalorder %s23, 1
      %p219 = por %p217, %p218
      %p221 = scmp.ne.s32.totalorder %s204, %s220
      %p222 = scmp.eq.s32.totalorder %s23, 0
      %p223 = por %p221, %p222
      %p224 = scmp.le.s32.totalorder 1, %s17
      %p225 = scmp.lt.s32.totalorder %s17, 3
      %p226 = pnand %p224, %p225
      %p227 = pneg %p226
      // Predicated region
      $region9: #{tpu_custom_call.1} parent=5 // pred_check
        _
      $region10: #{tpu_custom_call.1} parent=5 // pred_check_branch
        %229 = sbr.rel (%p226) target = $region12
      $region11: #{tpu_custom_call.1} parent=5 // pred_region
        %s230 = ssub.s32 %s17, 1
        // Predicated region
        $region13: #{tpu_custom_call.1} parent=11 // pred_check
          %p231 = pneg %p64
        $region14: #{tpu_custom_call.1} parent=11 // pred_check_branch
          %233 = sbr.rel (%p231) target = $region16
        $region15: #{tpu_custom_call.1} parent=11 // pred_region
          _
        $region16: #{tpu_custom_call.1} parent=11 // pred_fallthru
          _
        // Predicated region
        $region17: #{tpu_custom_call.1} parent=11 // pred_check
          %p234 = pneg %p85
        $region18: #{tpu_custom_call.1} parent=11 // pred_check_branch
          %236 = sbr.rel (%p234) target = $region20
        $region19: #{tpu_custom_call.1} parent=11 // pred_region
          _
        $region20: #{tpu_custom_call.1} parent=11 // pred_fallthru
          _
        // Predicated region
        $region21: #{tpu_custom_call.1} parent=11 // pred_check
          %p237 = pneg %p106
        $region22: #{tpu_custom_call.1} parent=11 // pred_check_branch
          %239 = sbr.rel (%p237) target = $region24
        $region23: #{tpu_custom_call.1} parent=11 // pred_region
          _
        $region24: #{tpu_custom_call.1} parent=11 // pred_fallthru
          _
        // Predicated region
        $region25: #{tpu_custom_call.1} parent=11 // pred_check
          %p240 = pneg %p127
        $region26: #{tpu_custom_call.1} parent=11 // pred_check_branch
          %242 = sbr.rel (%p240) target = $region28
        $region27: #{tpu_custom_call.1} parent=11 // pred_region
          _
        $region28: #{tpu_custom_call.1} parent=11 // pred_fallthru
          _
        // Predicated region
        $region29: #{tpu_custom_call.1} parent=11 // pred_check
          %p243 = pneg %p148
        $region30: #{tpu_custom_call.1} parent=11 // pred_check_branch
          %245 = sbr.rel (%p243) target = $region32
        $region31: #{tpu_custom_call.1} parent=11 // pred_region
          _
        $region32: #{tpu_custom_call.1} parent=11 // pred_fallthru
          _
        // Predicated region
        $region33: #{tpu_custom_call.1} parent=11 // pred_check
          %p246 = pneg %p169
        $region34: #{tpu_custom_call.1} parent=11 // pred_check_branch
          %248 = sbr.rel (%p246) target = $region36
        $region35: #{tpu_custom_call.1} parent=11 // pred_region
          _
        $region36: #{tpu_custom_call.1} parent=11 // pred_fallthru
          _
        // Predicated region
        $region37: #{tpu_custom_call.1} parent=11 // pred_check
          %p249 = pneg %p190
        $region38: #{tpu_custom_call.1} parent=11 // pred_check_branch
          %251 = sbr.rel (%p249) target = $region40
        $region39: #{tpu_custom_call.1} parent=11 // pred_region
          _
        $region40: #{tpu_custom_call.1} parent=11 // pred_fallthru
          _
      $region12: #{tpu_custom_call.1} parent=5 // pred_fallthru
        _
      %p252 = scmp.lt.s32.totalorder %s17, 2
      // Predicated region
      $region41: #{tpu_custom_call.1} parent=5 // pred_check
        %p253 = pneg %p252
      $region42: #{tpu_custom_call.1} parent=5 // pred_check_branch
        %255 = sbr.rel (%p253) target = $region44
      $region43: #{tpu_custom_call.1} parent=5 // pred_region
        // Predicated region
        $region45: #{tpu_custom_call.1} parent=43 // pred_check
          %p256 = pneg %p37
        $region46: #{tpu_custom_call.1} parent=43 // pred_check_branch
          %258 = sbr.rel (%p256) target = $region48
        $region47: #{tpu_custom_call.1} parent=43 // pred_region
          %p259 = scmp.lt.s32.totalorder %s17, 1
          %s260 = scalar_select %p259, %s17, 1
          %s261 = smul.addr %s260, 2
          %s262 = smul.addr %s261, 4
          %s263 = scalar_lea.vmem %s0, %s262
        $region48: #{tpu_custom_call.1} parent=43 // pred_fallthru
          _
      $region44: #{tpu_custom_call.1} parent=5 // pred_fallthru
        _
      %p264 = scmp.le.s32.totalorder 1, %s17
      %p265 = scmp.lt.s32.totalorder %s17, 3
      %p266 = pnand %p264, %p265
      %p267 = pneg %p266
      // Predicated region
      $region49: #{tpu_custom_call.1} parent=5 // pred_check
        _
      $region50: #{tpu_custom_call.1} parent=5 // pred_check_branch
        %269 = sbr.rel (%p266) target = $region52
      $region51: #{tpu_custom_call.1} parent=5 // pred_region
        %s270 = ssub.s32 %s17, 1
        %p271 = scmp.lt.s32.totalorder %s22, 1
        %s272 = scalar_select %p271, %s22, 1
        %s273 = smul.addr %s272, 2
        %s274 = smul.addr %s273, 4
        %s275 = scalar_lea.vmem %s0, %s274
        %p276 = pneg %p43
        %p277 = pneg %p40
        %p278 = pneg %p64
        %p279 = pneg %p61
        %p280 = pneg %p85
        %p281 = pneg %p82
        %p282 = pneg %p106
        %p283 = pneg %p103
        %p284 = pneg %p127
        %p285 = pneg %p124
        %p286 = pneg %p148
        %p287 = pneg %p145
        %p288 = pneg %p169
        %p289 = pneg %p166
        %p290 = pneg %p190
        %p291 = pneg %p187
        %p292 = pneg %p216
        %p293 = pneg %p213
        %s294 = sand.u32 %s203, 1
        %s295 = scalar_lea.sflag [#allocation5], %s294
        %s296 = sand.u32 %s203, 1
        %s297 = smul.addr %s296, 8
        %s298 = scalar_lea.vmem [#allocation4], %s297
        %p299 = scmp.lt.s32.totalorder %s22, 1
        %s300 = scalar_select %p299, %s22, 1
        %s301 = smul.addr %s300, 2
        %s302 = smul.addr %s301, 4
        %s303 = scalar_lea.vmem %s0, %s302
        %v304 = vld [vmem:[%s1] ss:$2 sm:$0x7]
        %s305 = scalar_lea.vmem %s1, 1
        %v306 = vld [vmem:[%s305] ss:$2 sm:$0x7]
        %307 = vst [vmem:[#allocation2] sm:$0xf] 0.0
        %308 = vst [vmem:[#allocation2 + $0xc] sm:$0xf] 0.0
        %309 = vst [vmem:[#allocation3] sm:$0x3] 0.0
        %310 = vst [vmem:[#allocation3 + $0x6] sm:$0x3] 0.0
        %v311 = vld [vmem:[%s303] sm:$0xff]
        %312 = vst [vmem:[#allocation2 + $0x4] sm:$0xff] %v311
        %v313 = vld [vmem:[#allocation2] sm:$0xff]
        %v314 = vld [vmem:[#allocation2 + $0x8] sm:$0xff]
        %v316 = vperm.slane %v304, 0
        %v317 = vperm.slane %v304, 1
        %v318 = vperm.slane %v304, 2
        %v319 = vrot.slane %v317, 4
        %vm320 = vcmask 1043456
        %v321 = vsel %vm320, %v316, %v319
        %322 = vrot.lane.b32.xlu0 %v321, 111
        %v323 = vpop.permute.xlu0 %322
        %324 = vrot.lane.b32.xlu0 %v318, 111
        %v325 = vpop.permute.xlu0 %324
        %v326 = vrot.slane %v323, 4
        %v327 = vrot.slane %v325, 4
        %vm328 = vcmask 908288
        %v329 = vsel %vm328, %v326, %v323
        %v330 = vsel %vm320, %v326, %v327
        %v331 = vsel %vm328, %v330, %v325
        %v334 = vmul.f32 %v313, %v329
        %v335 = vmul.f32 %v314, %v331
        %v337 = vperm.slane %v306, 0
        %v338 = vperm.slane %v306, 1
        %v339 = vperm.slane %v306, 2
        %v340 = vrot.slane %v338, 4
        %v341 = vsel %vm320, %v337, %v340
        %342 = vrot.lane.b32.xlu0 %v341, 113
        %v343 = vpop.permute.xlu0 %342
        %344 = vrot.lane.b32.xlu0 %v339, 113
        %v345 = vpop.permute.xlu0 %344
        %v346 = vrot.slane %v343, 4
        %v347 = vrot.slane %v345, 4
        %vm348 = vcmask 924672
        %v349 = vsel %vm348, %v346, %v343
        %v350 = vsel %vm320, %v346, %v347
        %v351 = vsel %vm348, %v350, %v345
        %v354 = vmul.f32 %v313, %v349
        %v355 = vmul.f32 %v314, %v351
        %v356 = vld [vmem:[%s2] sm:$0x3]
        %s357 = scalar_lea.vmem %s2, 2
        %v358 = vld [vmem:[%s357] sm:$0x3]
        %361 = vst [vmem:[#allocation1] ss:$2 sm:$0xff] %v313
        %s362 = scalar_lea.vmem [#allocation1], 16
        %363 = vst [vmem:[%s362] ss:$2 sm:$0xff] %v314
        %v364 = vld.sshfl [vmem:[#allocation1] sm:$0xff pattern:$0x75316420]
        %v365 = vld.sshfl [vmem:[#allocation1 + $0x8] sm:$0xff pattern:$0x75316420]
        %v366 = vld.sshfl [vmem:[#allocation1 + $0x10] sm:$0xff pattern:$0x75316420]
        %367 = vrot.lane.b32.xlu0 %v364, 16
        %v368 = vpop.permute.xlu0 %367
        %369 = vrot.lane.b32.xlu0 %v365, 16
        %v370 = vpop.permute.xlu0 %369
        %371 = vrot.lane.b32.xlu0 %v366, 16
        %v372 = vpop.permute.xlu0 %371
        %vm373 = vcmask 130048
        %v374 = vsel %vm373, %v368, %v370
        %v375 = vsel %vm373, %v370, %v372
        %vm376 = vcmask 31744
        %v378 = vsel %vm376, %v358, 0
        %v380 = vsel %vm320, %v374, 0
        %v382 = vsel %vm320, %v375, 0
        %384 = vmatpush.msra.mxu0 0.0
        %385 = vmatpush.msra.mxu0 0.0
        %386 = vmatpush.msra.mxu0 0.0
        %387 = vmatpush.msra.mxu0 0.0
        %388 = vmatpush.msra.mxu0 0.0
        %389 = vmatpush.msra.mxu0 0.0
        %390 = vmatpush.msra.mxu0 0.0
        %391 = vmatpush.msra.mxu0 0.0
        %392 = vmatpush.msra.mxu0 0.0
        %393 = vmatpush.msra.mxu0 0.0
        %394 = vmatpush.msra.mxu0 0.0
        %395 = vmatpush.msra.mxu0 0.0
        %396 = vmatpush.msra.mxu0 0.0
        %397 = vmatpush.msra.mxu0 0.0
        %398 = vmatpush.msra.mxu0 0.0
        %399 = vmatpush.msra.mxu0 %v380
        %400 = vmatmul.f32.gmra.mxu0 %v378
        %v401 = vpop.f32.mrf.mxu0
        %v402 = vadd.f32 0.0, %v401
        %403 = vdwg.mxu0
        %404 = vmatpush.msra.mxu0 0.0
        %405 = vmatpush.msra.mxu0 0.0
        %406 = vmatpush.msra.mxu0 0.0
        %407 = vmatpush.msra.mxu0 0.0
        %408 = vmatpush.msra.mxu0 0.0
        %409 = vmatpush.msra.mxu0 0.0
        %410 = vmatpush.msra.mxu0 0.0
        %411 = vmatpush.msra.mxu0 0.0
        %412 = vmatpush.msra.mxu0 0.0
        %413 = vmatpush.msra.mxu0 0.0
        %414 = vmatpush.msra.mxu0 0.0
        %415 = vmatpush.msra.mxu0 0.0
        %416 = vmatpush.msra.mxu0 0.0
        %417 = vmatpush.msra.mxu0 0.0
        %418 = vmatpush.msra.mxu0 0.0
        %419 = vmatpush.msra.mxu0 %v382
        %420 = vmatmul.f32.gmra.mxu0 %v378
        %v421 = vpop.f32.mrf.mxu0
        %v422 = vadd.f32 0.0, %v421
        %423 = vdwg.mxu0
        %426 = vst [vmem:[#allocation1] ss:$2 sm:$0xff] %v334
        %s427 = scalar_lea.vmem [#allocation1], 16
        %428 = vst [vmem:[%s427] ss:$2 sm:$0xff] %v335
        %v429 = vld.sshfl [vmem:[#allocation1] sm:$0xff pattern:$0x75316420]
        %v430 = vld.sshfl [vmem:[#allocation1 + $0x8] sm:$0xff pattern:$0x75316420]
        %v431 = vld.sshfl [vmem:[#allocation1 + $0x10] sm:$0xff pattern:$0x75316420]
        %432 = vrot.lane.b32.xlu0 %v429, 17
        %v433 = vpop.permute.xlu0 %432
        %434 = vrot.lane.b32.xlu0 %v430, 17
        %v435 = vpop.permute.xlu0 %434
        %436 = vrot.lane.b32.xlu0 %v431, 17
        %v437 = vpop.permute.xlu0 %436
        %vm438 = vcmask 138240
        %v439 = vsel %vm438, %v433, %v435
        %v440 = vsel %vm438, %v435, %v437
        %v442 = vsel %vm376, %v356, 0
        %v444 = vsel %vm320, %v439, 0
        %v446 = vsel %vm320, %v440, 0
        %448 = vmatpush.msra.mxu0 0.0
        %449 = vmatpush.msra.mxu0 0.0
        %450 = vmatpush.msra.mxu0 0.0
        %451 = vmatpush.msra.mxu0 0.0
        %452 = vmatpush.msra.mxu0 0.0
        %453 = vmatpush.msra.mxu0 0.0
        %454 = vmatpush.msra.mxu0 0.0
        %455 = vmatpush.msra.mxu0 0.0
        %456 = vmatpush.msra.mxu0 0.0
        %457 = vmatpush.msra.mxu0 0.0
        %458 = vmatpush.msra.mxu0 0.0
        %459 = vmatpush.msra.mxu0 0.0
        %460 = vmatpush.msra.mxu0 0.0
        %461 = vmatpush.msra.mxu0 0.0
        %462 = vmatpush.msra.mxu0 0.0
        %463 = vmatpush.msra.mxu0 %v444
        %464 = vmatmul.f32.gmra.mxu0 %v442
        %v465 = vpop.f32.mrf.mxu0
        %v466 = vadd.f32 %v402, %v465
        %467 = vdwg.mxu0
        %468 = vmatpush.msra.mxu0 0.0
        %469 = vmatpush.msra.mxu0 0.0
        %470 = vmatpush.msra.mxu0 0.0
        %471 = vmatpush.msra.mxu0 0.0
        %472 = vmatpush.msra.mxu0 0.0
        %473 = vmatpush.msra.mxu0 0.0
        %474 = vmatpush.msra.mxu0 0.0
        %475 = vmatpush.msra.mxu0 0.0
        %476 = vmatpush.msra.mxu0 0.0
        %477 = vmatpush.msra.mxu0 0.0
        %478 = vmatpush.msra.mxu0 0.0
        %479 = vmatpush.msra.mxu0 0.0
        %480 = vmatpush.msra.mxu0 0.0
        %481 = vmatpush.msra.mxu0 0.0
        %482 = vmatpush.msra.mxu0 0.0
        %483 = vmatpush.msra.mxu0 %v446
        %484 = vmatmul.f32.gmra.mxu0 %v442
        %v485 = vpop.f32.mrf.mxu0
        %v486 = vadd.f32 %v422, %v485
        %487 = vdwg.mxu0
        %s488 = scalar_lea.vmem %s2, 4
        %v489 = vld [vmem:[%s488] sm:$0x3]
        %492 = vst [vmem:[#allocation1] ss:$2 sm:$0xff] %v354
        %s493 = scalar_lea.vmem [#allocation1], 16
        %494 = vst [vmem:[%s493] ss:$2 sm:$0xff] %v355
        %v495 = vld.sshfl [vmem:[#allocation1] sm:$0xff pattern:$0x75316420]
        %v496 = vld.sshfl [vmem:[#allocation1 + $0x8] sm:$0xff pattern:$0x75316420]
        %v497 = vld.sshfl [vmem:[#allocation1 + $0x10] sm:$0xff pattern:$0x75316420]
        %498 = vrot.lane.b32.xlu0 %v495, 15
        %v499 = vpop.permute.xlu0 %498
        %500 = vrot.lane.b32.xlu0 %v496, 15
        %v501 = vpop.permute.xlu0 %500
        %502 = vrot.lane.b32.xlu0 %v497, 15
        %v503 = vpop.permute.xlu0 %502
        %vm504 = vcmask 121856
        %v505 = vsel %vm504, %v499, %v501
        %v506 = vsel %vm504, %v501, %v503
        %v508 = vsel %vm376, %v489, 0
        %v510 = vsel %vm320, %v505, 0
        %v512 = vsel %vm320, %v506, 0
        %514 = vmatpush.msra.mxu0 0.0
        %515 = vmatpush.msra.mxu0 0.0
        %516 = vmatpush.msra.mxu0 0.0
        %517 = vmatpush.msra.mxu0 0.0
        %518 = vmatpush.msra.mxu0 0.0
        %519 = vmatpush.msra.mxu0 0.0
        %520 = vmatpush.msra.mxu0 0.0
        %521 = vmatpush.msra.mxu0 0.0
        %522 = vmatpush.msra.mxu0 0.0
        %523 = vmatpush.msra.mxu0 0.0
        %524 = vmatpush.msra.mxu0 0.0
        %525 = vmatpush.msra.mxu0 0.0
        %526 = vmatpush.msra.mxu0 0.0
        %527 = vmatpush.msra.mxu0 0.0
        %528 = vmatpush.msra.mxu0 0.0
        %529 = vmatpush.msra.mxu0 %v510
        %530 = vmatmul.f32.gmra.mxu0 %v508
        %v531 = vpop.f32.mrf.mxu0
        %v532 = vadd.f32 0.0, %v531
        %533 = vdwg.mxu0
        %534 = vmatpush.msra.mxu0 0.0
        %535 = vmatpush.msra.mxu0 0.0
        %536 = vmatpush.msra.mxu0 0.0
        %537 = vmatpush.msra.mxu0 0.0
        %538 = vmatpush.msra.mxu0 0.0
        %539 = vmatpush.msra.mxu0 0.0
        %540 = vmatpush.msra.mxu0 0.0
        %541 = vmatpush.msra.mxu0 0.0
        %542 = vmatpush.msra.mxu0 0.0
        %543 = vmatpush.msra.mxu0 0.0
        %544 = vmatpush.msra.mxu0 0.0
        %545 = vmatpush.msra.mxu0 0.0
        %546 = vmatpush.msra.mxu0 0.0
        %547 = vmatpush.msra.mxu0 0.0
        %548 = vmatpush.msra.mxu0 0.0
        %549 = vmatpush.msra.mxu0 %v512
        %550 = vmatmul.f32.gmra.mxu0 %v508
        %v551 = vpop.f32.mrf.mxu0
        %v552 = vadd.f32 0.0, %v551
        %553 = vdwg.mxu0
        %v554 = vadd.f32 %v466, %v532
        %v555 = vadd.f32 %v486, %v552
        %s556 = scalar_lea.vmem %s2, 6
        %v557 = vld [vmem:[%s556] sm:$0x3]
        %558 = vst [vmem:[#allocation1] ss:$2 sm:$0xff] %v334
        %s559 = scalar_lea.vmem [#allocation1], 16
        %560 = vst [vmem:[%s559] ss:$2 sm:$0xff] %v335
        %v561 = vld.sshfl [vmem:[#allocation1] sm:$0xff pattern:$0x75316420]
        %v562 = vld.sshfl [vmem:[#allocation1 + $0x8] sm:$0xff pattern:$0x75316420]
        %v563 = vld.sshfl [vmem:[#allocation1 + $0x10] sm:$0xff pattern:$0x75316420]
        %564 = vrot.lane.b32.xlu0 %v561, 1
        %v565 = vpop.permute.xlu0 %564
        %566 = vrot.lane.b32.xlu0 %v562, 1
        %v567 = vpop.permute.xlu0 %566
        %568 = vrot.lane.b32.xlu0 %v563, 1
        %v569 = vpop.permute.xlu0 %568
        %vm570 = vcmask 7168
        %v571 = vsel %vm570, %v565, %v567
        %v572 = vsel %vm570, %v567, %v569
        %v574 = vsel %vm376, %v557, 0
        %v576 = vsel %vm320, %v571, 0
        %v578 = vsel %vm320, %v572, 0
        %580 = vmatpush.msra.mxu0 0.0
        %581 = vmatpush.msra.mxu0 0.0
        %582 = vmatpush.msra.mxu0 0.0
        %583 = vmatpush.msra.mxu0 0.0
        %584 = vmatpush.msra.mxu0 0.0
        %585 = vmatpush.msra.mxu0 0.0
        %586 = vmatpush.msra.mxu0 0.0
        %587 = vmatpush.msra.mxu0 0.0
        %588 = vmatpush.msra.mxu0 0.0
        %589 = vmatpush.msra.mxu0 0.0
        %590 = vmatpush.msra.mxu0 0.0
        %591 = vmatpush.msra.mxu0 0.0
        %592 = vmatpush.msra.mxu0 0.0
        %593 = vmatpush.msra.mxu0 0.0
        %594 = vmatpush.msra.mxu0 0.0
        %595 = vmatpush.msra.mxu0 %v576
        %596 = vmatmul.f32.gmra.mxu0 %v574
        %v597 = vpop.f32.mrf.mxu0
        %v598 = vadd.f32 0.0, %v597
        %599 = vdwg.mxu0
        %600 = vmatpush.msra.mxu0 0.0
        %601 = vmatpush.msra.mxu0 0.0
        %602 = vmatpush.msra.mxu0 0.0
        %603 = vmatpush.msra.mxu0 0.0
        %604 = vmatpush.msra.mxu0 0.0
        %605 = vmatpush.msra.mxu0 0.0
        %606 = vmatpush.msra.mxu0 0.0
        %607 = vmatpush.msra.mxu0 0.0
        %608 = vmatpush.msra.mxu0 0.0
        %609 = vmatpush.msra.mxu0 0.0
        %610 = vmatpush.msra.mxu0 0.0
        %611 = vmatpush.msra.mxu0 0.0
        %612 = vmatpush.msra.mxu0 0.0
        %613 = vmatpush.msra.mxu0 0.0
        %614 = vmatpush.msra.mxu0 0.0
        %615 = vmatpush.msra.mxu0 %v578
        %616 = vmatmul.f32.gmra.mxu0 %v574
        %v617 = vpop.f32.mrf.mxu0
        %v618 = vadd.f32 0.0, %v617
        %619 = vdwg.mxu0
        %v620 = vadd.f32 %v554, %v598
        %v621 = vadd.f32 %v555, %v618
        %s622 = scalar_lea.vmem %s2, 8
        %v623 = vld [vmem:[%s622] sm:$0x3]
        %624 = vst [vmem:[#allocation1] ss:$2 sm:$0xff] %v313
        %s625 = scalar_lea.vmem [#allocation1], 16
        %626 = vst [vmem:[%s625] ss:$2 sm:$0xff] %v314
        %v627 = vld.sshfl [vmem:[#allocation1 + $0x8] sm:$0xff pattern:$0x75316420]
        %v628 = vld.sshfl [vmem:[#allocation1 + $0x10] sm:$0xff pattern:$0x75316420]
        %v630 = vsel %vm376, %v623, 0
        %v632 = vsel %vm320, %v627, 0
        %v634 = vsel %vm320, %v628, 0
        %636 = vmatpush.msra.mxu0 0.0
        %637 = vmatpush.msra.mxu0 0.0
        %638 = vmatpush.msra.mxu0 0.0
        %639 = vmatpush.msra.mxu0 0.0
        %640 = vmatpush.msra.mxu0 0.0
        %641 = vmatpush.msra.mxu0 0.0
        %642 = vmatpush.msra.mxu0 0.0
        %643 = vmatpush.msra.mxu0 0.0
        %644 = vmatpush.msra.mxu0 0.0
        %645 = vmatpush.msra.mxu0 0.0
        %646 = vmatpush.msra.mxu0 0.0
        %647 = vmatpush.msra.mxu0 0.0
        %648 = vmatpush.msra.mxu0 0.0
        %649 = vmatpush.msra.mxu0 0.0
        %650 = vmatpush.msra.mxu0 0.0
        %651 = vmatpush.msra.mxu0 %v632
        %652 = vmatmul.f32.gmra.mxu0 %v630
        %v653 = vpop.f32.mrf.mxu0
        %v654 = vadd.f32 0.0, %v653
        %655 = vdwg.mxu0
        %656 = vmatpush.msra.mxu0 0.0
        %657 = vmatpush.msra.mxu0 0.0
        %658 = vmatpush.msra.mxu0 0.0
        %659 = vmatpush.msra.mxu0 0.0
        %660 = vmatpush.msra.mxu0 0.0
        %661 = vmatpush.msra.mxu0 0.0
        %662 = vmatpush.msra.mxu0 0.0
        %663 = vmatpush.msra.mxu0 0.0
        %664 = vmatpush.msra.mxu0 0.0
        %665 = vmatpush.msra.mxu0 0.0
        %666 = vmatpush.msra.mxu0 0.0
        %667 = vmatpush.msra.mxu0 0.0
        %668 = vmatpush.msra.mxu0 0.0
        %669 = vmatpush.msra.mxu0 0.0
        %670 = vmatpush.msra.mxu0 0.0
        %671 = vmatpush.msra.mxu0 %v634
        %672 = vmatmul.f32.gmra.mxu0 %v630
        %v673 = vpop.f32.mrf.mxu0
        %v674 = vadd.f32 0.0, %v673
        %675 = vdwg.mxu0
        %v676 = vadd.f32 %v620, %v654
        %v677 = vadd.f32 %v621, %v674
        %s678 = scalar_lea.vmem %s2, 10
        %v679 = vld [vmem:[%s678] sm:$0x3]
        %680 = vst [vmem:[#allocation1] ss:$2 sm:$0xff] %v354
        %s681 = scalar_lea.vmem [#allocation1], 16
        %682 = vst [vmem:[%s681] ss:$2 sm:$0xff] %v355
        %v683 = vld.sshfl [vmem:[#allocation1 + $0x8] sm:$0xff pattern:$0x75316420]
        %v684 = vld.sshfl [vmem:[#allocation1 + $0x10] sm:$0xff pattern:$0x75316420]
        %v685 = vld.sshfl [vmem:[#allocation1 + $0x18] sm:$0xff pattern:$0x75316420]
        %686 = vrot.lane.b32.xlu0 %v683, 127
        %v687 = vpop.permute.xlu0 %686
        %688 = vrot.lane.b32.xlu0 %v684, 127
        %v689 = vpop.permute.xlu0 %688
        %690 = vrot.lane.b32.xlu0 %v685, 127
        %v691 = vpop.permute.xlu0 %690
        %vm692 = vcmask 1039360
        %v693 = vsel %vm692, %v687, %v689
        %v694 = vsel %vm692, %v689, %v691
        %v696 = vsel %vm376, %v679, 0
        %v698 = vsel %vm320, %v693, 0
        %v700 = vsel %vm320, %v694, 0
        %702 = vmatpush.msra.mxu0 0.0
        %703 = vmatpush.msra.mxu0 0.0
        %704 = vmatpush.msra.mxu0 0.0
        %705 = vmatpush.msra.mxu0 0.0
        %706 = vmatpush.msra.mxu0 0.0
        %707 = vmatpush.msra.mxu0 0.0
        %708 = vmatpush.msra.mxu0 0.0
        %709 = vmatpush.msra.mxu0 0.0
        %710 = vmatpush.msra.mxu0 0.0
        %711 = vmatpush.msra.mxu0 0.0
        %712 = vmatpush.msra.mxu0 0.0
        %713 = vmatpush.msra.mxu0 0.0
        %714 = vmatpush.msra.mxu0 0.0
        %715 = vmatpush.msra.mxu0 0.0
        %716 = vmatpush.msra.mxu0 0.0
        %717 = vmatpush.msra.mxu0 %v698
        %718 = vmatmul.f32.gmra.mxu0 %v696
        %v719 = vpop.f32.mrf.mxu0
        %v720 = vadd.f32 0.0, %v719
        %721 = vdwg.mxu0
        %722 = vmatpush.msra.mxu0 0.0
        %723 = vmatpush.msra.mxu0 0.0
        %724 = vmatpush.msra.mxu0 0.0
        %725 = vmatpush.msra.mxu0 0.0
        %726 = vmatpush.msra.mxu0 0.0
        %727 = vmatpush.msra.mxu0 0.0
        %728 = vmatpush.msra.mxu0 0.0
        %729 = vmatpush.msra.mxu0 0.0
        %730 = vmatpush.msra.mxu0 0.0
        %731 = vmatpush.msra.mxu0 0.0
        %732 = vmatpush.msra.mxu0 0.0
        %733 = vmatpush.msra.mxu0 0.0
        %734 = vmatpush.msra.mxu0 0.0
        %735 = vmatpush.msra.mxu0 0.0
        %736 = vmatpush.msra.mxu0 0.0
        %737 = vmatpush.msra.mxu0 %v700
        %738 = vmatmul.f32.gmra.mxu0 %v696
        %v739 = vpop.f32.mrf.mxu0
        %v740 = vadd.f32 0.0, %v739
        %741 = vdwg.mxu0
        %v742 = vadd.f32 %v676, %v720
        %v743 = vadd.f32 %v677, %v740
        %s744 = scalar_lea.vmem %s2, 12
        %v745 = vld [vmem:[%s744] sm:$0x3]
        %746 = vst [vmem:[#allocation1] ss:$2 sm:$0xff] %v334
        %s747 = scalar_lea.vmem [#allocation1], 16
        %748 = vst [vmem:[%s747] ss:$2 sm:$0xff] %v335
        %v749 = vld.sshfl [vmem:[#allocation1 + $0x8] sm:$0xff pattern:$0x75316420]
        %v750 = vld.sshfl [vmem:[#allocation1 + $0x10] sm:$0xff pattern:$0x75316420]
        %v751 = vld.sshfl [vmem:[#allocation1 + $0x18] sm:$0xff pattern:$0x75316420]
        %752 = vrot.lane.b32.xlu0 %v749, 113
        %v753 = vpop.permute.xlu0 %752
        %754 = vrot.lane.b32.xlu0 %v750, 113
        %v755 = vpop.permute.xlu0 %754
        %756 = vrot.lane.b32.xlu0 %v751, 113
        %v757 = vpop.permute.xlu0 %756
        %v758 = vsel %vm348, %v753, %v755
        %v759 = vsel %vm348, %v755, %v757
        %v761 = vsel %vm376, %v745, 0
        %v763 = vsel %vm320, %v758, 0
        %v765 = vsel %vm320, %v759, 0
        %767 = vmatpush.msra.mxu0 0.0
        %768 = vmatpush.msra.mxu0 0.0
        %769 = vmatpush.msra.mxu0 0.0
        %770 = vmatpush.msra.mxu0 0.0
        %771 = vmatpush.msra.mxu0 0.0
        %772 = vmatpush.msra.mxu0 0.0
        %773 = vmatpush.msra.mxu0 0.0
        %774 = vmatpush.msra.mxu0 0.0
        %775 = vmatpush.msra.mxu0 0.0
        %776 = vmatpush.msra.mxu0 0.0
        %777 = vmatpush.msra.mxu0 0.0
        %778 = vmatpush.msra.mxu0 0.0
        %779 = vmatpush.msra.mxu0 0.0
        %780 = vmatpush.msra.mxu0 0.0
        %781 = vmatpush.msra.mxu0 0.0
        %782 = vmatpush.msra.mxu0 %v763
        %783 = vmatmul.f32.gmra.mxu0 %v761
        %v784 = vpop.f32.mrf.mxu0
        %v785 = vadd.f32 0.0, %v784
        %786 = vdwg.mxu0
        %787 = vmatpush.msra.mxu0 0.0
        %788 = vmatpush.msra.mxu0 0.0
        %789 = vmatpush.msra.mxu0 0.0
        %790 = vmatpush.msra.mxu0 0.0
        %791 = vmatpush.msra.mxu0 0.0
        %792 = vmatpush.msra.mxu0 0.0
        %793 = vmatpush.msra.mxu0 0.0
        %794 = vmatpush.msra.mxu0 0.0
        %795 = vmatpush.msra.mxu0 0.0
        %796 = vmatpush.msra.mxu0 0.0
        %797 = vmatpush.msra.mxu0 0.0
        %798 = vmatpush.msra.mxu0 0.0
        %799 = vmatpush.msra.mxu0 0.0
        %800 = vmatpush.msra.mxu0 0.0
        %801 = vmatpush.msra.mxu0 0.0
        %802 = vmatpush.msra.mxu0 %v765
        %803 = vmatmul.f32.gmra.mxu0 %v761
        %v804 = vpop.f32.mrf.mxu0
        %v805 = vadd.f32 0.0, %v804
        %806 = vdwg.mxu0
        %v807 = vadd.f32 %v742, %v785
        %v808 = vadd.f32 %v743, %v805
        %s809 = scalar_lea.vmem %s2, 14
        %v810 = vld [vmem:[%s809] sm:$0x3]
        %811 = vst [vmem:[#allocation1] ss:$2 sm:$0xff] %v313
        %s812 = scalar_lea.vmem [#allocation1], 16
        %813 = vst [vmem:[%s812] ss:$2 sm:$0xff] %v314
        %v814 = vld.sshfl [vmem:[#allocation1 + $0x8] sm:$0xff pattern:$0x75316420]
        %v815 = vld.sshfl [vmem:[#allocation1 + $0x10] sm:$0xff pattern:$0x75316420]
        %v816 = vld.sshfl [vmem:[#allocation1 + $0x18] sm:$0xff pattern:$0x75316420]
        %817 = vrot.lane.b32.xlu0 %v814, 112
        %v818 = vpop.permute.xlu0 %817
        %819 = vrot.lane.b32.xlu0 %v815, 112
        %v820 = vpop.permute.xlu0 %819
        %821 = vrot.lane.b32.xlu0 %v816, 112
        %v822 = vpop.permute.xlu0 %821
        %vm823 = vcmask 916480
        %v824 = vsel %vm823, %v818, %v820
        %v825 = vsel %vm823, %v820, %v822
        %v827 = vsel %vm376, %v810, 0
        %v829 = vsel %vm320, %v824, 0
        %v831 = vsel %vm320, %v825, 0
        %833 = vmatpush.msra.mxu0 0.0
        %834 = vmatpush.msra.mxu0 0.0
        %835 = vmatpush.msra.mxu0 0.0
        %836 = vmatpush.msra.mxu0 0.0
        %837 = vmatpush.msra.mxu0 0.0
        %838 = vmatpush.msra.mxu0 0.0
        %839 = vmatpush.msra.mxu0 0.0
        %840 = vmatpush.msra.mxu0 0.0
        %841 = vmatpush.msra.mxu0 0.0
        %842 = vmatpush.msra.mxu0 0.0
        %843 = vmatpush.msra.mxu0 0.0
        %844 = vmatpush.msra.mxu0 0.0
        %845 = vmatpush.msra.mxu0 0.0
        %846 = vmatpush.msra.mxu0 0.0
        %847 = vmatpush.msra.mxu0 0.0
        %848 = vmatpush.msra.mxu0 %v829
        %849 = vmatmul.f32.gmra.mxu0 %v827
        %v850 = vpop.f32.mrf.mxu0
        %v851 = vadd.f32 0.0, %v850
        %852 = vdwg.mxu0
        %853 = vmatpush.msra.mxu0 0.0
        %854 = vmatpush.msra.mxu0 0.0
        %855 = vmatpush.msra.mxu0 0.0
        %856 = vmatpush.msra.mxu0 0.0
        %857 = vmatpush.msra.mxu0 0.0
        %858 = vmatpush.msra.mxu0 0.0
        %859 = vmatpush.msra.mxu0 0.0
        %860 = vmatpush.msra.mxu0 0.0
        %861 = vmatpush.msra.mxu0 0.0
        %862 = vmatpush.msra.mxu0 0.0
        %863 = vmatpush.msra.mxu0 0.0
        %864 = vmatpush.msra.mxu0 0.0
        %865 = vmatpush.msra.mxu0 0.0
        %866 = vmatpush.msra.mxu0 0.0
        %867 = vmatpush.msra.mxu0 0.0
        %868 = vmatpush.msra.mxu0 %v831
        %869 = vmatmul.f32.gmra.mxu0 %v827
        %v870 = vpop.f32.mrf.mxu0
        %v871 = vadd.f32 0.0, %v870
        %872 = vdwg.mxu0
        %v873 = vadd.f32 %v807, %v851
        %v874 = vadd.f32 %v808, %v871
        %s875 = scalar_lea.vmem %s2, 16
        %v876 = vld [vmem:[%s875] sm:$0x3]
        %877 = vst [vmem:[#allocation1] ss:$2 sm:$0xff] %v354
        %s878 = scalar_lea.vmem [#allocation1], 16
        %879 = vst [vmem:[%s878] ss:$2 sm:$0xff] %v355
        %v880 = vld.sshfl [vmem:[#allocation1 + $0x8] sm:$0xff pattern:$0x75316420]
        %v881 = vld.sshfl [vmem:[#allocation1 + $0x10] sm:$0xff pattern:$0x75316420]
        %v882 = vld.sshfl [vmem:[#allocation1 + $0x18] sm:$0xff pattern:$0x75316420]
        %883 = vrot.lane.b32.xlu0 %v880, 111
        %v884 = vpop.permute.xlu0 %883
        %885 = vrot.lane.b32.xlu0 %v881, 111
        %v886 = vpop.permute.xlu0 %885
        %887 = vrot.lane.b32.xlu0 %v882, 111
        %v888 = vpop.permute.xlu0 %887
        %v889 = vsel %vm328, %v884, %v886
        %v890 = vsel %vm328, %v886, %v888
        %v892 = vsel %vm376, %v876, 0
        %v894 = vsel %vm320, %v889, 0
        %v896 = vsel %vm320, %v890, 0
        %898 = vmatpush.msra.mxu0 0.0
        %899 = vmatpush.msra.mxu0 0.0
        %900 = vmatpush.msra.mxu0 0.0
        %901 = vmatpush.msra.mxu0 0.0
        %902 = vmatpush.msra.mxu0 0.0
        %903 = vmatpush.msra.mxu0 0.0
        %904 = vmatpush.msra.mxu0 0.0
        %905 = vmatpush.msra.mxu0 0.0
        %906 = vmatpush.msra.mxu0 0.0
        %907 = vmatpush.msra.mxu0 0.0
        %908 = vmatpush.msra.mxu0 0.0
        %909 = vmatpush.msra.mxu0 0.0
        %910 = vmatpush.msra.mxu0 0.0
        %911 = vmatpush.msra.mxu0 0.0
        %912 = vmatpush.msra.mxu0 0.0
        %913 = vmatpush.msra.mxu0 %v894
        %914 = vmatmul.f32.gmra.mxu0 %v892
        %v915 = vpop.f32.mrf.mxu0
        %v916 = vadd.f32 0.0, %v915
        %917 = vdwg.mxu0
        %918 = vmatpush.msra.mxu0 0.0
        %919 = vmatpush.msra.mxu0 0.0
        %920 = vmatpush.msra.mxu0 0.0
        %921 = vmatpush.msra.mxu0 0.0
        %922 = vmatpush.msra.mxu0 0.0
        %923 = vmatpush.msra.mxu0 0.0
        %924 = vmatpush.msra.mxu0 0.0
        %925 = vmatpush.msra.mxu0 0.0
        %926 = vmatpush.msra.mxu0 0.0
        %927 = vmatpush.msra.mxu0 0.0
        %928 = vmatpush.msra.mxu0 0.0
        %929 = vmatpush.msra.mxu0 0.0
        %930 = vmatpush.msra.mxu0 0.0
        %931 = vmatpush.msra.mxu0 0.0
        %932 = vmatpush.msra.mxu0 0.0
        %933 = vmatpush.msra.mxu0 %v896
        %934 = vmatmul.f32.gmra.mxu0 %v892
        %v935 = vpop.f32.mrf.mxu0
        %v936 = vadd.f32 0.0, %v935
        %937 = vdwg.mxu0
        %v938 = vadd.f32 %v873, %v916
        %v939 = vadd.f32 %v874, %v936
        %v940 = vld [vmem:[%s3] sm:$0x3]
        %942 = vset.pattern.permute.xlu0 0
        %943 = vperm.xlu0 %942, %v940
        %v944 = vpop.permute.xlu0 %943
        %v946 = vadd.f32 %v938, %v944
        %v947 = vadd.f32 %v939, %v944
        %v948 = vmax.f32 %v946, 0.0
        %v949 = vmax.f32 %v947, 0.0
        %v952 = vrot.slane %v949, 6
        %vm953 = vcmask 1041408
        %v954 = vsel %vm953, %v948, %v952
        %956 = vst [vmem:[#allocation3 + $0x2] sm:$0xf] %v954
        %v957 = vld [vmem:[#allocation3] sm:$0xff]
        %v958 = vrot.slane %v317, 6
        %v959 = vrot.slane %v318, 4
        %v960 = vsel %vm953, %v316, %v958
        %v961 = vsel %vm320, %v960, %v959
        %962 = vrot.lane.b32.xlu0 %v961, 111
        %v963 = vpop.permute.xlu0 %962
        %v964 = vrot.slane %v963, 6
        %v965 = vsel %vm328, %v964, %v963
        %v967 = vmul.f32 %v957, %v965
        %v968 = vrot.slane %v338, 6
        %v969 = vrot.slane %v339, 4
        %v970 = vsel %vm953, %v337, %v968
        %v971 = vsel %vm320, %v970, %v969
        %972 = vrot.lane.b32.xlu0 %v971, 113
        %v973 = vpop.permute.xlu0 %972
        %v974 = vrot.slane %v973, 6
        %v975 = vsel %vm348, %v974, %v973
        %v977 = vmul.f32 %v957, %v975
        %v978 = vld [vmem:[%s4] sm:$0xf]
        %s979 = scalar_lea.vmem %s4, 4
        %v980 = vld [vmem:[%s979] sm:$0xf]
        %982 = vst [vmem:[#allocation1] ss:$4 sm:$0xff] %v957
        %v983 = vld.sshfl [vmem:[#allocation1] sm:$0xff pattern:$0x73625140]
        %v984 = vld.sshfl [vmem:[#allocation1 + $0x8] sm:$0xff pattern:$0x73625140]
        %v985 = vld.sshfl [vmem:[#allocation1 + $0x10] sm:$0xff pattern:$0x73625140]
        %986 = vrot.lane.b32.xlu0 %v983, 16
        %v987 = vpop.permute.xlu0 %986
        %988 = vrot.lane.b32.xlu0 %v984, 16
        %v989 = vpop.permute.xlu0 %988
        %990 = vrot.lane.b32.xlu0 %v985, 16
        %v991 = vpop.permute.xlu0 %990
        %v992 = vsel %vm373, %v987, %v989
        %v993 = vsel %vm373, %v989, %v991
        %vm994 = vcmask 15360
        %v996 = vsel %vm994, %v980, 0
        %v998 = vsel %vm953, %v992, 0
        %v1000 = vsel %vm953, %v993, 0
        %1002 = vmatpush.msra.mxu0 0.0
        %1003 = vmatpush.msra.mxu0 0.0
        %1004 = vmatpush.msra.mxu0 0.0
        %1005 = vmatpush.msra.mxu0 0.0
        %1006 = vmatpush.msra.mxu0 0.0
        %1007 = vmatpush.msra.mxu0 0.0
        %1008 = vmatpush.msra.mxu0 0.0
        %1009 = vmatpush.msra.mxu0 0.0
        %1010 = vmatpush.msra.mxu0 0.0
        %1011 = vmatpush.msra.mxu0 0.0
        %1012 = vmatpush.msra.mxu0 0.0
        %1013 = vmatpush.msra.mxu0 0.0
        %1014 = vmatpush.msra.mxu0 0.0
        %1015 = vmatpush.msra.mxu0 0.0
        %1016 = vmatpush.msra.mxu0 0.0
        %1017 = vmatpush.msra.mxu0 %v998
        %1018 = vmatmul.f32.gmra.mxu0 %v996
        %v1019 = vpop.f32.mrf.mxu0
        %v1020 = vadd.f32 0.0, %v1019
        %1021 = vdwg.mxu0
        %1022 = vmatpush.msra.mxu0 0.0
        %1023 = vmatpush.msra.mxu0 0.0
        %1024 = vmatpush.msra.mxu0 0.0
        %1025 = vmatpush.msra.mxu0 0.0
        %1026 = vmatpush.msra.mxu0 0.0
        %1027 = vmatpush.msra.mxu0 0.0
        %1028 = vmatpush.msra.mxu0 0.0
        %1029 = vmatpush.msra.mxu0 0.0
        %1030 = vmatpush.msra.mxu0 0.0
        %1031 = vmatpush.msra.mxu0 0.0
        %1032 = vmatpush.msra.mxu0 0.0
        %1033 = vmatpush.msra.mxu0 0.0
        %1034 = vmatpush.msra.mxu0 0.0
        %1035 = vmatpush.msra.mxu0 0.0
        %1036 = vmatpush.msra.mxu0 0.0
        %1037 = vmatpush.msra.mxu0 %v1000
        %1038 = vmatmul.f32.gmra.mxu0 %v996
        %v1039 = vpop.f32.mrf.mxu0
        %v1040 = vadd.f32 0.0, %v1039
        %1041 = vdwg.mxu0
        %1043 = vst [vmem:[#allocation1] ss:$4 sm:$0xff] %v967
        %v1044 = vld.sshfl [vmem:[#allocation1] sm:$0xff pattern:$0x73625140]
        %v1045 = vld.sshfl [vmem:[#allocation1 + $0x8] sm:$0xff pattern:$0x73625140]
        %v1046 = vld.sshfl [vmem:[#allocation1 + $0x10] sm:$0xff pattern:$0x73625140]
        %1047 = vrot.lane.b32.xlu0 %v1044, 17
        %v1048 = vpop.permute.xlu0 %1047
        %1049 = vrot.lane.b32.xlu0 %v1045, 17
        %v1050 = vpop.permute.xlu0 %1049
        %1051 = vrot.lane.b32.xlu0 %v1046, 17
        %v1052 = vpop.permute.xlu0 %1051
        %v1053 = vsel %vm438, %v1048, %v1050
        %v1054 = vsel %vm438, %v1050, %v1052
        %v1056 = vsel %vm994, %v978, 0
        %v1058 = vsel %vm953, %v1053, 0
        %v1060 = vsel %vm953, %v1054, 0
        %1062 = vmatpush.msra.mxu0 0.0
        %1063 = vmatpush.msra.mxu0 0.0
        %1064 = vmatpush.msra.mxu0 0.0
        %1065 = vmatpush.msra.mxu0 0.0
        %1066 = vmatpush.msra.mxu0 0.0
        %1067 = vmatpush.msra.mxu0 0.0
        %1068 = vmatpush.msra.mxu0 0.0
        %1069 = vmatpush.msra.mxu0 0.0
        %1070 = vmatpush.msra.mxu0 0.0
        %1071 = vmatpush.msra.mxu0 0.0
        %1072 = vmatpush.msra.mxu0 0.0
        %1073 = vmatpush.msra.mxu0 0.0
        %1074 = vmatpush.msra.mxu0 0.0
        %1075 = vmatpush.msra.mxu0 0.0
        %1076 = vmatpush.msra.mxu0 0.0
        %1077 = vmatpush.msra.mxu0 %v1058
        %1078 = vmatmul.f32.gmra.mxu0 %v1056
        %v1079 = vpop.f32.mrf.mxu0
        %v1080 = vadd.f32 %v1020, %v1079
        %1081 = vdwg.mxu0
        %1082 = vmatpush.msra.mxu0 0.0
        %1083 = vmatpush.msra.mxu0 0.0
        %1084 = vmatpush.msra.mxu0 0.0
        %1085 = vmatpush.msra.mxu0 0.0
        %1086 = vmatpush.msra.mxu0 0.0
        %1087 = vmatpush.msra.mxu0 0.0
        %1088 = vmatpush.msra.mxu0 0.0
        %1089 = vmatpush.msra.mxu0 0.0
        %1090 = vmatpush.msra.mxu0 0.0
        %1091 = vmatpush.msra.mxu0 0.0
        %1092 = vmatpush.msra.mxu0 0.0
        %1093 = vmatpush.msra.mxu0 0.0
        %1094 = vmatpush.msra.mxu0 0.0
        %1095 = vmatpush.msra.mxu0 0.0
        %1096 = vmatpush.msra.mxu0 0.0
        %1097 = vmatpush.msra.mxu0 %v1060
        %1098 = vmatmul.f32.gmra.mxu0 %v1056
        %v1099 = vpop.f32.mrf.mxu0
        %v1100 = vadd.f32 %v1040, %v1099
        %1101 = vdwg.mxu0
        %s1102 = scalar_lea.vmem %s4, 8
        %v1103 = vld [vmem:[%s1102] sm:$0xf]
        %1105 = vst [vmem:[#allocation1] ss:$4 sm:$0xff] %v977
        %v1106 = vld.sshfl [vmem:[#allocation1] sm:$0xff pattern:$0x73625140]
        %v1107 = vld.sshfl [vmem:[#allocation1 + $0x8] sm:$0xff pattern:$0x73625140]
        %v1108 = vld.sshfl [vmem:[#allocation1 + $0x10] sm:$0xff pattern:$0x73625140]
        %1109 = vrot.lane.b32.xlu0 %v1106, 15
        %v1110 = vpop.permute.xlu0 %1109
        %1111 = vrot.lane.b32.xlu0 %v1107, 15
        %v1112 = vpop.permute.xlu0 %1111
        %1113 = vrot.lane.b32.xlu0 %v1108, 15
        %v1114 = vpop.permute.xlu0 %1113
        %v1115 = vsel %vm504, %v1110, %v1112
        %v1116 = vsel %vm504, %v1112, %v1114
        %v1118 = vsel %vm994, %v1103, 0
        %v1120 = vsel %vm953, %v1115, 0
        %v1122 = vsel %vm953, %v1116, 0
        %1124 = vmatpush.msra.mxu0 0.0
        %1125 = vmatpush.msra.mxu0 0.0
        %1126 = vmatpush.msra.mxu0 0.0
        %1127 = vmatpush.msra.mxu0 0.0
        %1128 = vmatpush.msra.mxu0 0.0
        %1129 = vmatpush.msra.mxu0 0.0
        %1130 = vmatpush.msra.mxu0 0.0
        %1131 = vmatpush.msra.mxu0 0.0
        %1132 = vmatpush.msra.mxu0 0.0
        %1133 = vmatpush.msra.mxu0 0.0
        %1134 = vmatpush.msra.mxu0 0.0
        %1135 = vmatpush.msra.mxu0 0.0
        %1136 = vmatpush.msra.mxu0 0.0
        %1137 = vmatpush.msra.mxu0 0.0
        %1138 = vmatpush.msra.mxu0 0.0
        %1139 = vmatpush.msra.mxu0 %v1120
        %1140 = vmatmul.f32.gmra.mxu0 %v1118
        %v1141 = vpop.f32.mrf.mxu0
        %v1142 = vadd.f32 0.0, %v1141
        %1143 = vdwg.mxu0
        %1144 = vmatpush.msra.mxu0 0.0
        %1145 = vmatpush.msra.mxu0 0.0
        %1146 = vmatpush.msra.mxu0 0.0
        %1147 = vmatpush.msra.mxu0 0.0
        %1148 = vmatpush.msra.mxu0 0.0
        %1149 = vmatpush.msra.mxu0 0.0
        %1150 = vmatpush.msra.mxu0 0.0
        %1151 = vmatpush.msra.mxu0 0.0
        %1152 = vmatpush.msra.mxu0 0.0
        %1153 = vmatpush.msra.mxu0 0.0
        %1154 = vmatpush.msra.mxu0 0.0
        %1155 = vmatpush.msra.mxu0 0.0
        %1156 = vmatpush.msra.mxu0 0.0
        %1157 = vmatpush.msra.mxu0 0.0
        %1158 = vmatpush.msra.mxu0 0.0
        %1159 = vmatpush.msra.mxu0 %v1122
        %1160 = vmatmul.f32.gmra.mxu0 %v1118
        %v1161 = vpop.f32.mrf.mxu0
        %v1162 = vadd.f32 0.0, %v1161
        %1163 = vdwg.mxu0
        %v1164 = vadd.f32 %v1080, %v1142
        %v1165 = vadd.f32 %v1100, %v1162
        %s1166 = scalar_lea.vmem %s4, 12
        %v1167 = vld [vmem:[%s1166] sm:$0xf]
        %1168 = vst [vmem:[#allocation1] ss:$4 sm:$0xff] %v967
        %v1169 = vld.sshfl [vmem:[#allocation1] sm:$0xff pattern:$0x73625140]
        %v1170 = vld.sshfl [vmem:[#allocation1 + $0x8] sm:$0xff pattern:$0x73625140]
        %v1171 = vld.sshfl [vmem:[#allocation1 + $0x10] sm:$0xff pattern:$0x73625140]
        %1172 = vrot.lane.b32.xlu0 %v1169, 1
        %v1173 = vpop.permute.xlu0 %1172
        %1174 = vrot.lane.b32.xlu0 %v1170, 1
        %v1175 = vpop.permute.xlu0 %1174
        %1176 = vrot.lane.b32.xlu0 %v1171, 1
        %v1177 = vpop.permute.xlu0 %1176
        %v1178 = vsel %vm570, %v1173, %v1175
        %v1179 = vsel %vm570, %v1175, %v1177
        %v1181 = vsel %vm994, %v1167, 0
        %v1183 = vsel %vm953, %v1178, 0
        %v1185 = vsel %vm953, %v1179, 0
        %1187 = vmatpush.msra.mxu0 0.0
        %1188 = vmatpush.msra.mxu0 0.0
        %1189 = vmatpush.msra.mxu0 0.0
        %1190 = vmatpush.msra.mxu0 0.0
        %1191 = vmatpush.msra.mxu0 0.0
        %1192 = vmatpush.msra.mxu0 0.0
        %1193 = vmatpush.msra.mxu0 0.0
        %1194 = vmatpush.msra.mxu0 0.0
        %1195 = vmatpush.msra.mxu0 0.0
        %1196 = vmatpush.msra.mxu0 0.0
        %1197 = vmatpush.msra.mxu0 0.0
        %1198 = vmatpush.msra.mxu0 0.0
        %1199 = vmatpush.msra.mxu0 0.0
        %1200 = vmatpush.msra.mxu0 0.0
        %1201 = vmatpush.msra.mxu0 0.0
        %1202 = vmatpush.msra.mxu0 %v1183
        %1203 = vmatmul.f32.gmra.mxu0 %v1181
        %v1204 = vpop.f32.mrf.mxu0
        %v1205 = vadd.f32 0.0, %v1204
        %1206 = vdwg.mxu0
        %1207 = vmatpush.msra.mxu0 0.0
        %1208 = vmatpush.msra.mxu0 0.0
        %1209 = vmatpush.msra.mxu0 0.0
        %1210 = vmatpush.msra.mxu0 0.0
        %1211 = vmatpush.msra.mxu0 0.0
        %1212 = vmatpush.msra.mxu0 0.0
        %1213 = vmatpush.msra.mxu0 0.0
        %1214 = vmatpush.msra.mxu0 0.0
        %1215 = vmatpush.msra.mxu0 0.0
        %1216 = vmatpush.msra.mxu0 0.0
        %1217 = vmatpush.msra.mxu0 0.0
        %1218 = vmatpush.msra.mxu0 0.0
        %1219 = vmatpush.msra.mxu0 0.0
        %1220 = vmatpush.msra.mxu0 0.0
        %1221 = vmatpush.msra.mxu0 0.0
        %1222 = vmatpush.msra.mxu0 %v1185
        %1223 = vmatmul.f32.gmra.mxu0 %v1181
        %v1224 = vpop.f32.mrf.mxu0
        %v1225 = vadd.f32 0.0, %v1224
        %1226 = vdwg.mxu0
        %v1227 = vadd.f32 %v1164, %v1205
        %v1228 = vadd.f32 %v1165, %v1225
        %s1229 = scalar_lea.vmem %s4, 16
        %v1230 = vld [vmem:[%s1229] sm:$0xf]
        %1231 = vst [vmem:[#allocation1] ss:$4 sm:$0xff] %v957
        %v1232 = vld.sshfl [vmem:[#allocation1 + $0x8] sm:$0xff pattern:$0x73625140]
        %v1233 = vld.sshfl [vmem:[#allocation1 + $0x10] sm:$0xff pattern:$0x73625140]
        %v1235 = vsel %vm994, %v1230, 0
        %v1237 = vsel %vm953, %v1232, 0
        %v1239 = vsel %vm953, %v1233, 0
        %1241 = vmatpush.msra.mxu0 0.0
        %1242 = vmatpush.msra.mxu0 0.0
        %1243 = vmatpush.msra.mxu0 0.0
        %1244 = vmatpush.msra.mxu0 0.0
        %1245 = vmatpush.msra.mxu0 0.0
        %1246 = vmatpush.msra.mxu0 0.0
        %1247 = vmatpush.msra.mxu0 0.0
        %1248 = vmatpush.msra.mxu0 0.0
        %1249 = vmatpush.msra.mxu0 0.0
        %1250 = vmatpush.msra.mxu0 0.0
        %1251 = vmatpush.msra.mxu0 0.0
        %1252 = vmatpush.msra.mxu0 0.0
        %1253 = vmatpush.msra.mxu0 0.0
        %1254 = vmatpush.msra.mxu0 0.0
        %1255 = vmatpush.msra.mxu0 0.0
        %1256 = vmatpush.msra.mxu0 %v1237
        %1257 = vmatmul.f32.gmra.mxu0 %v1235
        %v1258 = vpop.f32.mrf.mxu0
        %v1259 = vadd.f32 0.0, %v1258
        %1260 = vdwg.mxu0
        %1261 = vmatpush.msra.mxu0 0.0
        %1262 = vmatpush.msra.mxu0 0.0
        %1263 = vmatpush.msra.mxu0 0.0
        %1264 = vmatpush.msra.mxu0 0.0
        %1265 = vmatpush.msra.mxu0 0.0
        %1266 = vmatpush.msra.mxu0 0.0
        %1267 = vmatpush.msra.mxu0 0.0
        %1268 = vmatpush.msra.mxu0 0.0
        %1269 = vmatpush.msra.mxu0 0.0
        %1270 = vmatpush.msra.mxu0 0.0
        %1271 = vmatpush.msra.mxu0 0.0
        %1272 = vmatpush.msra.mxu0 0.0
        %1273 = vmatpush.msra.mxu0 0.0
        %1274 = vmatpush.msra.mxu0 0.0
        %1275 = vmatpush.msra.mxu0 0.0
        %1276 = vmatpush.msra.mxu0 %v1239
        %1277 = vmatmul.f32.gmra.mxu0 %v1235
        %v1278 = vpop.f32.mrf.mxu0
        %v1279 = vadd.f32 0.0, %v1278
        %1280 = vdwg.mxu0
        %v1281 = vadd.f32 %v1227, %v1259
        %v1282 = vadd.f32 %v1228, %v1279
        %s1283 = scalar_lea.vmem %s4, 20
        %v1284 = vld [vmem:[%s1283] sm:$0xf]
        %1285 = vst [vmem:[#allocation1] ss:$4 sm:$0xff] %v977
        %v1286 = vld.sshfl [vmem:[#allocation1 + $0x8] sm:$0xff pattern:$0x73625140]
        %v1287 = vld.sshfl [vmem:[#allocation1 + $0x10] sm:$0xff pattern:$0x73625140]
        %v1288 = vld.sshfl [vmem:[#allocation1 + $0x18] sm:$0xff pattern:$0x73625140]
        %1289 = vrot.lane.b32.xlu0 %v1286, 127
        %v1290 = vpop.permute.xlu0 %1289
        %1291 = vrot.lane.b32.xlu0 %v1287, 127
        %v1292 = vpop.permute.xlu0 %1291
        %1293 = vrot.lane.b32.xlu0 %v1288, 127
        %v1294 = vpop.permute.xlu0 %1293
        %v1295 = vsel %vm692, %v1290, %v1292
        %v1296 = vsel %vm692, %v1292, %v1294
        %v1298 = vsel %vm994, %v1284, 0
        %v1300 = vsel %vm953, %v1295, 0
        %v1302 = vsel %vm953, %v1296, 0
        %1304 = vmatpush.msra.mxu0 0.0
        %1305 = vmatpush.msra.mxu0 0.0
        %1306 = vmatpush.msra.mxu0 0.0
        %1307 = vmatpush.msra.mxu0 0.0
        %1308 = vmatpush.msra.mxu0 0.0
        %1309 = vmatpush.msra.mxu0 0.0
        %1310 = vmatpush.msra.mxu0 0.0
        %1311 = vmatpush.msra.mxu0 0.0
        %1312 = vmatpush.msra.mxu0 0.0
        %1313 = vmatpush.msra.mxu0 0.0
        %1314 = vmatpush.msra.mxu0 0.0
        %1315 = vmatpush.msra.mxu0 0.0
        %1316 = vmatpush.msra.mxu0 0.0
        %1317 = vmatpush.msra.mxu0 0.0
        %1318 = vmatpush.msra.mxu0 0.0
        %1319 = vmatpush.msra.mxu0 %v1300
        %1320 = vmatmul.f32.gmra.mxu0 %v1298
        %v1321 = vpop.f32.mrf.mxu0
        %v1322 = vadd.f32 0.0, %v1321
        %1323 = vdwg.mxu0
        %1324 = vmatpush.msra.mxu0 0.0
        %1325 = vmatpush.msra.mxu0 0.0
        %1326 = vmatpush.msra.mxu0 0.0
        %1327 = vmatpush.msra.mxu0 0.0
        %1328 = vmatpush.msra.mxu0 0.0
        %1329 = vmatpush.msra.mxu0 0.0
        %1330 = vmatpush.msra.mxu0 0.0
        %1331 = vmatpush.msra.mxu0 0.0
        %1332 = vmatpush.msra.mxu0 0.0
        %1333 = vmatpush.msra.mxu0 0.0
        %1334 = vmatpush.msra.mxu0 0.0
        %1335 = vmatpush.msra.mxu0 0.0
        %1336 = vmatpush.msra.mxu0 0.0
        %1337 = vmatpush.msra.mxu0 0.0
        %1338 = vmatpush.msra.mxu0 0.0
        %1339 = vmatpush.msra.mxu0 %v1302
        %1340 = vmatmul.f32.gmra.mxu0 %v1298
        %v1341 = vpop.f32.mrf.mxu0
        %v1342 = vadd.f32 0.0, %v1341
        %1343 = vdwg.mxu0
        %v1344 = vadd.f32 %v1281, %v1322
        %v1345 = vadd.f32 %v1282, %v1342
        %s1346 = scalar_lea.vmem %s4, 24
        %v1347 = vld [vmem:[%s1346] sm:$0xf]
        %1348 = vst [vmem:[#allocation1] ss:$4 sm:$0xff] %v967
        %v1349 = vld.sshfl [vmem:[#allocation1 + $0x8] sm:$0xff pattern:$0x73625140]
        %v1350 = vld.sshfl [vmem:[#allocation1 + $0x10] sm:$0xff pattern:$0x73625140]
        %v1351 = vld.sshfl [vmem:[#allocation1 + $0x18] sm:$0xff pattern:$0x73625140]
        %1352 = vrot.lane.b32.xlu0 %v1349, 113
        %v1353 = vpop.permute.xlu0 %1352
        %1354 = vrot.lane.b32.xlu0 %v1350, 113
        %v1355 = vpop.permute.xlu0 %1354
        %1356 = vrot.lane.b32.xlu0 %v1351, 113
        %v1357 = vpop.permute.xlu0 %1356
        %v1358 = vsel %vm348, %v1353, %v1355
        %v1359 = vsel %vm348, %v1355, %v1357
        %v1361 = vsel %vm994, %v1347, 0
        %v1363 = vsel %vm953, %v1358, 0
        %v1365 = vsel %vm953, %v1359, 0
        %1367 = vmatpush.msra.mxu0 0.0
        %1368 = vmatpush.msra.mxu0 0.0
        %1369 = vmatpush.msra.mxu0 0.0
        %1370 = vmatpush.msra.mxu0 0.0
        %1371 = vmatpush.msra.mxu0 0.0
        %1372 = vmatpush.msra.mxu0 0.0
        %1373 = vmatpush.msra.mxu0 0.0
        %1374 = vmatpush.msra.mxu0 0.0
        %1375 = vmatpush.msra.mxu0 0.0
        %1376 = vmatpush.msra.mxu0 0.0
        %1377 = vmatpush.msra.mxu0 0.0
        %1378 = vmatpush.msra.mxu0 0.0
        %1379 = vmatpush.msra.mxu0 0.0
        %1380 = vmatpush.msra.mxu0 0.0
        %1381 = vmatpush.msra.mxu0 0.0
        %1382 = vmatpush.msra.mxu0 %v1363
        %1383 = vmatmul.f32.gmra.mxu0 %v1361
        %v1384 = vpop.f32.mrf.mxu0
        %v1385 = vadd.f32 0.0, %v1384
        %1386 = vdwg.mxu0
        %1387 = vmatpush.msra.mxu0 0.0
        %1388 = vmatpush.msra.mxu0 0.0
        %1389 = vmatpush.msra.mxu0 0.0
        %1390 = vmatpush.msra.mxu0 0.0
        %1391 = vmatpush.msra.mxu0 0.0
        %1392 = vmatpush.msra.mxu0 0.0
        %1393 = vmatpush.msra.mxu0 0.0
        %1394 = vmatpush.msra.mxu0 0.0
        %1395 = vmatpush.msra.mxu0 0.0
        %1396 = vmatpush.msra.mxu0 0.0
        %1397 = vmatpush.msra.mxu0 0.0
        %1398 = vmatpush.msra.mxu0 0.0
        %1399 = vmatpush.msra.mxu0 0.0
        %1400 = vmatpush.msra.mxu0 0.0
        %1401 = vmatpush.msra.mxu0 0.0
        %1402 = vmatpush.msra.mxu0 %v1365
        %1403 = vmatmul.f32.gmra.mxu0 %v1361
        %v1404 = vpop.f32.mrf.mxu0
        %v1405 = vadd.f32 0.0, %v1404
        %1406 = vdwg.mxu0
        %v1407 = vadd.f32 %v1344, %v1385
        %v1408 = vadd.f32 %v1345, %v1405
        %s1409 = scalar_lea.vmem %s4, 28
        %v1410 = vld [vmem:[%s1409] sm:$0xf]
        %1411 = vst [vmem:[#allocation1] ss:$4 sm:$0xff] %v957
        %v1412 = vld.sshfl [vmem:[#allocation1 + $0x8] sm:$0xff pattern:$0x73625140]
        %v1413 = vld.sshfl [vmem:[#allocation1 + $0x10] sm:$0xff pattern:$0x73625140]
        %v1414 = vld.sshfl [vmem:[#allocation1 + $0x18] sm:$0xff pattern:$0x73625140]
        %1415 = vrot.lane.b32.xlu0 %v1412, 112
        %v1416 = vpop.permute.xlu0 %1415
        %1417 = vrot.lane.b32.xlu0 %v1413, 112
        %v1418 = vpop.permute.xlu0 %1417
        %1419 = vrot.lane.b32.xlu0 %v1414, 112
        %v1420 = vpop.permute.xlu0 %1419
        %v1421 = vsel %vm823, %v1416, %v1418
        %v1422 = vsel %vm823, %v1418, %v1420
        %v1424 = vsel %vm994, %v1410, 0
        %v1426 = vsel %vm953, %v1421, 0
        %v1428 = vsel %vm953, %v1422, 0
        %1430 = vmatpush.msra.mxu0 0.0
        %1431 = vmatpush.msra.mxu0 0.0
        %1432 = vmatpush.msra.mxu0 0.0
        %1433 = vmatpush.msra.mxu0 0.0
        %1434 = vmatpush.msra.mxu0 0.0
        %1435 = vmatpush.msra.mxu0 0.0
        %1436 = vmatpush.msra.mxu0 0.0
        %1437 = vmatpush.msra.mxu0 0.0
        %1438 = vmatpush.msra.mxu0 0.0
        %1439 = vmatpush.msra.mxu0 0.0
        %1440 = vmatpush.msra.mxu0 0.0
        %1441 = vmatpush.msra.mxu0 0.0
        %1442 = vmatpush.msra.mxu0 0.0
        %1443 = vmatpush.msra.mxu0 0.0
        %1444 = vmatpush.msra.mxu0 0.0
        %1445 = vmatpush.msra.mxu0 %v1426
        %1446 = vmatmul.f32.gmra.mxu0 %v1424
        %v1447 = vpop.f32.mrf.mxu0
        %v1448 = vadd.f32 0.0, %v1447
        %1449 = vdwg.mxu0
        %1450 = vmatpush.msra.mxu0 0.0
        %1451 = vmatpush.msra.mxu0 0.0
        %1452 = vmatpush.msra.mxu0 0.0
        %1453 = vmatpush.msra.mxu0 0.0
        %1454 = vmatpush.msra.mxu0 0.0
        %1455 = vmatpush.msra.mxu0 0.0
        %1456 = vmatpush.msra.mxu0 0.0
        %1457 = vmatpush.msra.mxu0 0.0
        %1458 = vmatpush.msra.mxu0 0.0
        %1459 = vmatpush.msra.mxu0 0.0
        %1460 = vmatpush.msra.mxu0 0.0
        %1461 = vmatpush.msra.mxu0 0.0
        %1462 = vmatpush.msra.mxu0 0.0
        %1463 = vmatpush.msra.mxu0 0.0
        %1464 = vmatpush.msra.mxu0 0.0
        %1465 = vmatpush.msra.mxu0 %v1428
        %1466 = vmatmul.f32.gmra.mxu0 %v1424
        %v1467 = vpop.f32.mrf.mxu0
        %v1468 = vadd.f32 0.0, %v1467
        %1469 = vdwg.mxu0
        %v1470 = vadd.f32 %v1407, %v1448
        %v1471 = vadd.f32 %v1408, %v1468
        %s1472 = scalar_lea.vmem %s4, 32
        %v1473 = vld [vmem:[%s1472] sm:$0xf]
        %1474 = vst [vmem:[#allocation1] ss:$4 sm:$0xff] %v977
        %v1475 = vld.sshfl [vmem:[#allocation1 + $0x8] sm:$0xff pattern:$0x73625140]
        %v1476 = vld.sshfl [vmem:[#allocation1 + $0x10] sm:$0xff pattern:$0x73625140]
        %v1477 = vld.sshfl [vmem:[#allocation1 + $0x18] sm:$0xff pattern:$0x73625140]
        %1478 = vrot.lane.b32.xlu0 %v1475, 111
        %v1479 = vpop.permute.xlu0 %1478
        %1480 = vrot.lane.b32.xlu0 %v1476, 111
        %v1481 = vpop.permute.xlu0 %1480
        %1482 = vrot.lane.b32.xlu0 %v1477, 111
        %v1483 = vpop.permute.xlu0 %1482
        %v1484 = vsel %vm328, %v1479, %v1481
        %v1485 = vsel %vm328, %v1481, %v1483
        %v1487 = vsel %vm994, %v1473, 0
        %v1489 = vsel %vm953, %v1484, 0
        %v1491 = vsel %vm953, %v1485, 0
        %1493 = vmatpush.msra.mxu0 0.0
        %1494 = vmatpush.msra.mxu0 0.0
        %1495 = vmatpush.msra.mxu0 0.0
        %1496 = vmatpush.msra.mxu0 0.0
        %1497 = vmatpush.msra.mxu0 0.0
        %1498 = vmatpush.msra.mxu0 0.0
        %1499 = vmatpush.msra.mxu0 0.0
        %1500 = vmatpush.msra.mxu0 0.0
        %1501 = vmatpush.msra.mxu0 0.0
        %1502 = vmatpush.msra.mxu0 0.0
        %1503 = vmatpush.msra.mxu0 0.0
        %1504 = vmatpush.msra.mxu0 0.0
        %1505 = vmatpush.msra.mxu0 0.0
        %1506 = vmatpush.msra.mxu0 0.0
        %1507 = vmatpush.msra.mxu0 0.0
        %1508 = vmatpush.msra.mxu0 %v1489
        %1509 = vmatmul.f32.gmra.mxu0 %v1487
        %v1510 = vpop.f32.mrf.mxu0
        %v1511 = vadd.f32 0.0, %v1510
        %1512 = vdwg.mxu0
        %1513 = vmatpush.msra.mxu0 0.0
        %1514 = vmatpush.msra.mxu0 0.0
        %1515 = vmatpush.msra.mxu0 0.0
        %1516 = vmatpush.msra.mxu0 0.0
        %1517 = vmatpush.msra.mxu0 0.0
        %1518 = vmatpush.msra.mxu0 0.0
        %1519 = vmatpush.msra.mxu0 0.0
        %1520 = vmatpush.msra.mxu0 0.0
        %1521 = vmatpush.msra.mxu0 0.0
        %1522 = vmatpush.msra.mxu0 0.0
        %1523 = vmatpush.msra.mxu0 0.0
        %1524 = vmatpush.msra.mxu0 0.0
        %1525 = vmatpush.msra.mxu0 0.0
        %1526 = vmatpush.msra.mxu0 0.0
        %1527 = vmatpush.msra.mxu0 0.0
        %1528 = vmatpush.msra.mxu0 %v1491
        %1529 = vmatmul.f32.gmra.mxu0 %v1487
        %v1530 = vpop.f32.mrf.mxu0
        %v1531 = vadd.f32 0.0, %v1530
        %1532 = vdwg.mxu0
        %v1533 = vadd.f32 %v1470, %v1511
        %v1534 = vadd.f32 %v1471, %v1531
        %v1535 = vld [vmem:[%s5] sm:$0xf]
        %1537 = vset.pattern.permute.xlu0 0
        %1538 = vperm.xlu0 %1537, %v1535
        %v1539 = vpop.permute.xlu0 %1538
        %v1541 = vadd.f32 %v1533, %v1539
        %v1542 = vadd.f32 %v1534, %v1539
        %v1543 = vmax.f32 %v1541, 0.0
        %v1544 = vmax.f32 %v1542, 0.0
        %v1547 = vrot.slane %v1544, 4
        %v1548 = vsel %vm320, %v1543, %v1547
        %1550 = vst [vmem:[%s298] sm:$0x33] %v1548
        %v1551 = vrot.slane %v1548, 6
        %v1552 = vrot.slane %v1551, 4
        %1554 = vst [vmem:[#allocation2 + $0x4] sm:$0x33] %v1552
        %v1555 = vld [vmem:[#allocation2] sm:$0x33]
        %v1556 = vld [vmem:[#allocation2 + $0x8] sm:$0x33]
        %v1557 = vmul.f32 %v1555, %v329
        %v1558 = vmul.f32 %v1556, %v331
        %v1559 = vmul.f32 %v1555, %v349
        %v1560 = vmul.f32 %v1556, %v351
        %v1561 = vld [vmem:[%s6] sm:$0x3]
        %s1562 = scalar_lea.vmem %s6, 2
        %v1563 = vld [vmem:[%s1562] sm:$0x3]
        %1566 = vst [vmem:[#allocation1] ss:$2 sm:$0xff] %v1555
        %s1567 = scalar_lea.vmem [#allocation1], 16
        %1568 = vst [vmem:[%s1567] ss:$2 sm:$0xff] %v1556
        %v1569 = vld.sshfl [vmem:[#allocation1] sm:$0xff pattern:$0x75316420]
        %v1570 = vld.sshfl [vmem:[#allocation1 + $0x8] sm:$0xff pattern:$0x75316420]
        %v1571 = vld.sshfl [vmem:[#allocation1 + $0x10] sm:$0xff pattern:$0x75316420]
        %1572 = vrot.lane.b32.xlu0 %v1569, 16
        %v1573 = vpop.permute.xlu0 %1572
        %1574 = vrot.lane.b32.xlu0 %v1570, 16
        %v1575 = vpop.permute.xlu0 %1574
        %1576 = vrot.lane.b32.xlu0 %v1571, 16
        %v1577 = vpop.permute.xlu0 %1576
        %v1578 = vsel %vm373, %v1573, %v1575
        %v1579 = vsel %vm373, %v1575, %v1577
        %v1581 = vsel %vm994, %v1563, 0
        %v1583 = vsel %vm953, %v1578, 0
        %v1585 = vsel %vm953, %v1579, 0
        %1587 = vmatpush.msra.mxu0 0.0
        %1588 = vmatpush.msra.mxu0 0.0
        %1589 = vmatpush.msra.mxu0 0.0
        %1590 = vmatpush.msra.mxu0 0.0
        %1591 = vmatpush.msra.mxu0 0.0
        %1592 = vmatpush.msra.mxu0 0.0
        %1593 = vmatpush.msra.mxu0 0.0
        %1594 = vmatpush.msra.mxu0 0.0
        %1595 = vmatpush.msra.mxu0 0.0
        %1596 = vmatpush.msra.mxu0 0.0
        %1597 = vmatpush.msra.mxu0 0.0
        %1598 = vmatpush.msra.mxu0 0.0
        %1599 = vmatpush.msra.mxu0 0.0
        %1600 = vmatpush.msra.mxu0 0.0
        %1601 = vmatpush.msra.mxu0 0.0
        %1602 = vmatpush.msra.mxu0 %v1583
        %1603 = vmatmul.f32.gmra.mxu0 %v1581
        %v1604 = vpop.f32.mrf.mxu0
        %v1605 = vadd.f32 0.0, %v1604
        %1606 = vdwg.mxu0
        %1607 = vmatpush.msra.mxu0 0.0
        %1608 = vmatpush.msra.mxu0 0.0
        %1609 = vmatpush.msra.mxu0 0.0
        %1610 = vmatpush.msra.mxu0 0.0
        %1611 = vmatpush.msra.mxu0 0.0
        %1612 = vmatpush.msra.mxu0 0.0
        %1613 = vmatpush.msra.mxu0 0.0
        %1614 = vmatpush.msra.mxu0 0.0
        %1615 = vmatpush.msra.mxu0 0.0
        %1616 = vmatpush.msra.mxu0 0.0
        %1617 = vmatpush.msra.mxu0 0.0
        %1618 = vmatpush.msra.mxu0 0.0
        %1619 = vmatpush.msra.mxu0 0.0
        %1620 = vmatpush.msra.mxu0 0.0
        %1621 = vmatpush.msra.mxu0 0.0
        %1622 = vmatpush.msra.mxu0 %v1585
        %1623 = vmatmul.f32.gmra.mxu0 %v1581
        %v1624 = vpop.f32.mrf.mxu0
        %v1625 = vadd.f32 0.0, %v1624
        %1626 = vdwg.mxu0
        %1629 = vst [vmem:[#allocation1] ss:$2 sm:$0xff] %v1557
        %s1630 = scalar_lea.vmem [#allocation1], 16
        %1631 = vst [vmem:[%s1630] ss:$2 sm:$0xff] %v1558
        %v1632 = vld.sshfl [vmem:[#allocation1] sm:$0xff pattern:$0x75316420]
        %v1633 = vld.sshfl [vmem:[#allocation1 + $0x8] sm:$0xff pattern:$0x75316420]
        %v1634 = vld.sshfl [vmem:[#allocation1 + $0x10] sm:$0xff pattern:$0x75316420]
        %1635 = vrot.lane.b32.xlu0 %v1632, 17
        %v1636 = vpop.permute.xlu0 %1635
        %1637 = vrot.lane.b32.xlu0 %v1633, 17
        %v1638 = vpop.permute.xlu0 %1637
        %1639 = vrot.lane.b32.xlu0 %v1634, 17
        %v1640 = vpop.permute.xlu0 %1639
        %v1641 = vsel %vm438, %v1636, %v1638
        %v1642 = vsel %vm438, %v1638, %v1640
        %v1644 = vsel %vm994, %v1561, 0
        %v1646 = vsel %vm953, %v1641, 0
        %v1648 = vsel %vm953, %v1642, 0
        %1650 = vmatpush.msra.mxu0 0.0
        %1651 = vmatpush.msra.mxu0 0.0
        %1652 = vmatpush.msra.mxu0 0.0
        %1653 = vmatpush.msra.mxu0 0.0
        %1654 = vmatpush.msra.mxu0 0.0
        %1655 = vmatpush.msra.mxu0 0.0
        %1656 = vmatpush.msra.mxu0 0.0
        %1657 = vmatpush.msra.mxu0 0.0
        %1658 = vmatpush.msra.mxu0 0.0
        %1659 = vmatpush.msra.mxu0 0.0
        %1660 = vmatpush.msra.mxu0 0.0
        %1661 = vmatpush.msra.mxu0 0.0
        %1662 = vmatpush.msra.mxu0 0.0
        %1663 = vmatpush.msra.mxu0 0.0
        %1664 = vmatpush.msra.mxu0 0.0
        %1665 = vmatpush.msra.mxu0 %v1646
        %1666 = vmatmul.f32.gmra.mxu0 %v1644
        %v1667 = vpop.f32.mrf.mxu0
        %v1668 = vadd.f32 %v1605, %v1667
        %1669 = vdwg.mxu0
        %1670 = vmatpush.msra.mxu0 0.0
        %1671 = vmatpush.msra.mxu0 0.0
        %1672 = vmatpush.msra.mxu0 0.0
        %1673 = vmatpush.msra.mxu0 0.0
        %1674 = vmatpush.msra.mxu0 0.0
        %1675 = vmatpush.msra.mxu0 0.0
        %1676 = vmatpush.msra.mxu0 0.0
        %1677 = vmatpush.msra.mxu0 0.0
        %1678 = vmatpush.msra.mxu0 0.0
        %1679 = vmatpush.msra.mxu0 0.0
        %1680 = vmatpush.msra.mxu0 0.0
        %1681 = vmatpush.msra.mxu0 0.0
        %1682 = vmatpush.msra.mxu0 0.0
        %1683 = vmatpush.msra.mxu0 0.0
        %1684 = vmatpush.msra.mxu0 0.0
        %1685 = vmatpush.msra.mxu0 %v1648
        %1686 = vmatmul.f32.gmra.mxu0 %v1644
        %v1687 = vpop.f32.mrf.mxu0
        %v1688 = vadd.f32 %v1625, %v1687
        %1689 = vdwg.mxu0
        %s1690 = scalar_lea.vmem %s6, 4
        %v1691 = vld [vmem:[%s1690] sm:$0x3]
        %1694 = vst [vmem:[#allocation1] ss:$2 sm:$0xff] %v1559
        %s1695 = scalar_lea.vmem [#allocation1], 16
        %1696 = vst [vmem:[%s1695] ss:$2 sm:$0xff] %v1560
        %v1697 = vld.sshfl [vmem:[#allocation1] sm:$0xff pattern:$0x75316420]
        %v1698 = vld.sshfl [vmem:[#allocation1 + $0x8] sm:$0xff pattern:$0x75316420]
        %v1699 = vld.sshfl [vmem:[#allocation1 + $0x10] sm:$0xff pattern:$0x75316420]
        %1700 = vrot.lane.b32.xlu0 %v1697, 15
        %v1701 = vpop.permute.xlu0 %1700
        %1702 = vrot.lane.b32.xlu0 %v1698, 15
        %v1703 = vpop.permute.xlu0 %1702
        %1704 = vrot.lane.b32.xlu0 %v1699, 15
        %v1705 = vpop.permute.xlu0 %1704
        %v1706 = vsel %vm504, %v1701, %v1703
        %v1707 = vsel %vm504, %v1703, %v1705
        %v1709 = vsel %vm994, %v1691, 0
        %v1711 = vsel %vm953, %v1706, 0
        %v1713 = vsel %vm953, %v1707, 0
        %1715 = vmatpush.msra.mxu0 0.0
        %1716 = vmatpush.msra.mxu0 0.0
        %1717 = vmatpush.msra.mxu0 0.0
        %1718 = vmatpush.msra.mxu0 0.0
        %1719 = vmatpush.msra.mxu0 0.0
        %1720 = vmatpush.msra.mxu0 0.0
        %1721 = vmatpush.msra.mxu0 0.0
        %1722 = vmatpush.msra.mxu0 0.0
        %1723 = vmatpush.msra.mxu0 0.0
        %1724 = vmatpush.msra.mxu0 0.0
        %1725 = vmatpush.msra.mxu0 0.0
        %1726 = vmatpush.msra.mxu0 0.0
        %1727 = vmatpush.msra.mxu0 0.0
        %1728 = vmatpush.msra.mxu0 0.0
        %1729 = vmatpush.msra.mxu0 0.0
        %1730 = vmatpush.msra.mxu0 %v1711
        %1731 = vmatmul.f32.gmra.mxu0 %v1709
        %v1732 = vpop.f32.mrf.mxu0
        %v1733 = vadd.f32 0.0, %v1732
        %1734 = vdwg.mxu0
        %1735 = vmatpush.msra.mxu0 0.0
        %1736 = vmatpush.msra.mxu0 0.0
        %1737 = vmatpush.msra.mxu0 0.0
        %1738 = vmatpush.msra.mxu0 0.0
        %1739 = vmatpush.msra.mxu0 0.0
        %1740 = vmatpush.msra.mxu0 0.0
        %1741 = vmatpush.msra.mxu0 0.0
        %1742 = vmatpush.msra.mxu0 0.0
        %1743 = vmatpush.msra.mxu0 0.0
        %1744 = vmatpush.msra.mxu0 0.0
        %1745 = vmatpush.msra.mxu0 0.0
        %1746 = vmatpush.msra.mxu0 0.0
        %1747 = vmatpush.msra.mxu0 0.0
        %1748 = vmatpush.msra.mxu0 0.0
        %1749 = vmatpush.msra.mxu0 0.0
        %1750 = vmatpush.msra.mxu0 %v1713
        %1751 = vmatmul.f32.gmra.mxu0 %v1709
        %v1752 = vpop.f32.mrf.mxu0
        %v1753 = vadd.f32 0.0, %v1752
        %1754 = vdwg.mxu0
        %v1755 = vadd.f32 %v1668, %v1733
        %v1756 = vadd.f32 %v1688, %v1753
        %s1757 = scalar_lea.vmem %s6, 6
        %v1758 = vld [vmem:[%s1757] sm:$0x3]
        %1759 = vst [vmem:[#allocation1] ss:$2 sm:$0xff] %v1557
        %s1760 = scalar_lea.vmem [#allocation1], 16
        %1761 = vst [vmem:[%s1760] ss:$2 sm:$0xff] %v1558
        %v1762 = vld.sshfl [vmem:[#allocation1] sm:$0xff pattern:$0x75316420]
        %v1763 = vld.sshfl [vmem:[#allocation1 + $0x8] sm:$0xff pattern:$0x75316420]
        %v1764 = vld.sshfl [vmem:[#allocation1 + $0x10] sm:$0xff pattern:$0x75316420]
        %1765 = vrot.lane.b32.xlu0 %v1762, 1
        %v1766 = vpop.permute.xlu0 %1765
        %1767 = vrot.lane.b32.xlu0 %v1763, 1
        %v1768 = vpop.permute.xlu0 %1767
        %1769 = vrot.lane.b32.xlu0 %v1764, 1
        %v1770 = vpop.permute.xlu0 %1769
        %v1771 = vsel %vm570, %v1766, %v1768
        %v1772 = vsel %vm570, %v1768, %v1770
        %v1774 = vsel %vm994, %v1758, 0
        %v1776 = vsel %vm953, %v1771, 0
        %v1778 = vsel %vm953, %v1772, 0
        %1780 = vmatpush.msra.mxu0 0.0
        %1781 = vmatpush.msra.mxu0 0.0
        %1782 = vmatpush.msra.mxu0 0.0
        %1783 = vmatpush.msra.mxu0 0.0
        %1784 = vmatpush.msra.mxu0 0.0
        %1785 = vmatpush.msra.mxu0 0.0
        %1786 = vmatpush.msra.mxu0 0.0
        %1787 = vmatpush.msra.mxu0 0.0
        %1788 = vmatpush.msra.mxu0 0.0
        %1789 = vmatpush.msra.mxu0 0.0
        %1790 = vmatpush.msra.mxu0 0.0
        %1791 = vmatpush.msra.mxu0 0.0
        %1792 = vmatpush.msra.mxu0 0.0
        %1793 = vmatpush.msra.mxu0 0.0
        %1794 = vmatpush.msra.mxu0 0.0
        %1795 = vmatpush.msra.mxu0 %v1776
        %1796 = vmatmul.f32.gmra.mxu0 %v1774
        %v1797 = vpop.f32.mrf.mxu0
        %v1798 = vadd.f32 0.0, %v1797
        %1799 = vdwg.mxu0
        %1800 = vmatpush.msra.mxu0 0.0
        %1801 = vmatpush.msra.mxu0 0.0
        %1802 = vmatpush.msra.mxu0 0.0
        %1803 = vmatpush.msra.mxu0 0.0
        %1804 = vmatpush.msra.mxu0 0.0
        %1805 = vmatpush.msra.mxu0 0.0
        %1806 = vmatpush.msra.mxu0 0.0
        %1807 = vmatpush.msra.mxu0 0.0
        %1808 = vmatpush.msra.mxu0 0.0
        %1809 = vmatpush.msra.mxu0 0.0
        %1810 = vmatpush.msra.mxu0 0.0
        %1811 = vmatpush.msra.mxu0 0.0
        %1812 = vmatpush.msra.mxu0 0.0
        %1813 = vmatpush.msra.mxu0 0.0
        %1814 = vmatpush.msra.mxu0 0.0
        %1815 = vmatpush.msra.mxu0 %v1778
        %1816 = vmatmul.f32.gmra.mxu0 %v1774
        %v1817 = vpop.f32.mrf.mxu0
        %v1818 = vadd.f32 0.0, %v1817
        %1819 = vdwg.mxu0
        %v1820 = vadd.f32 %v1755, %v1798
        %v1821 = vadd.f32 %v1756, %v1818
        %s1822 = scalar_lea.vmem %s6, 8
        %v1823 = vld [vmem:[%s1822] sm:$0x3]
        %1824 = vst [vmem:[#allocation1] ss:$2 sm:$0xff] %v1555
        %s1825 = scalar_lea.vmem [#allocation1], 16
        %1826 = vst [vmem:[%s1825] ss:$2 sm:$0xff] %v1556
        %v1827 = vld.sshfl [vmem:[#allocation1 + $0x8] sm:$0xff pattern:$0x75316420]
        %v1828 = vld.sshfl [vmem:[#allocation1 + $0x10] sm:$0xff pattern:$0x75316420]
        %v1830 = vsel %vm994, %v1823, 0
        %v1832 = vsel %vm953, %v1827, 0
        %v1834 = vsel %vm953, %v1828, 0
        %1836 = vmatpush.msra.mxu0 0.0
        %1837 = vmatpush.msra.mxu0 0.0
        %1838 = vmatpush.msra.mxu0 0.0
        %1839 = vmatpush.msra.mxu0 0.0
        %1840 = vmatpush.msra.mxu0 0.0
        %1841 = vmatpush.msra.mxu0 0.0
        %1842 = vmatpush.msra.mxu0 0.0
        %1843 = vmatpush.msra.mxu0 0.0
        %1844 = vmatpush.msra.mxu0 0.0
        %1845 = vmatpush.msra.mxu0 0.0
        %1846 = vmatpush.msra.mxu0 0.0
        %1847 = vmatpush.msra.mxu0 0.0
        %1848 = vmatpush.msra.mxu0 0.0
        %1849 = vmatpush.msra.mxu0 0.0
        %1850 = vmatpush.msra.mxu0 0.0
        %1851 = vmatpush.msra.mxu0 %v1832
        %1852 = vmatmul.f32.gmra.mxu0 %v1830
        %v1853 = vpop.f32.mrf.mxu0
        %v1854 = vadd.f32 0.0, %v1853
        %1855 = vdwg.mxu0
        %1856 = vmatpush.msra.mxu0 0.0
        %1857 = vmatpush.msra.mxu0 0.0
        %1858 = vmatpush.msra.mxu0 0.0
        %1859 = vmatpush.msra.mxu0 0.0
        %1860 = vmatpush.msra.mxu0 0.0
        %1861 = vmatpush.msra.mxu0 0.0
        %1862 = vmatpush.msra.mxu0 0.0
        %1863 = vmatpush.msra.mxu0 0.0
        %1864 = vmatpush.msra.mxu0 0.0
        %1865 = vmatpush.msra.mxu0 0.0
        %1866 = vmatpush.msra.mxu0 0.0
        %1867 = vmatpush.msra.mxu0 0.0
        %1868 = vmatpush.msra.mxu0 0.0
        %1869 = vmatpush.msra.mxu0 0.0
        %1870 = vmatpush.msra.mxu0 0.0
        %1871 = vmatpush.msra.mxu0 %v1834
        %1872 = vmatmul.f32.gmra.mxu0 %v1830
        %v1873 = vpop.f32.mrf.mxu0
        %v1874 = vadd.f32 0.0, %v1873
        %1875 = vdwg.mxu0
        %v1876 = vadd.f32 %v1820, %v1854
        %v1877 = vadd.f32 %v1821, %v1874
        %s1878 = scalar_lea.vmem %s6, 10
        %v1879 = vld [vmem:[%s1878] sm:$0x3]
        %1880 = vst [vmem:[#allocation1] ss:$2 sm:$0xff] %v1559
        %s1881 = scalar_lea.vmem [#allocation1], 16
        %1882 = vst [vmem:[%s1881] ss:$2 sm:$0xff] %v1560
        %v1883 = vld.sshfl [vmem:[#allocation1 + $0x8] sm:$0xff pattern:$0x75316420]
        %v1884 = vld.sshfl [vmem:[#allocation1 + $0x10] sm:$0xff pattern:$0x75316420]
        %v1885 = vld.sshfl [vmem:[#allocation1 + $0x18] sm:$0xff pattern:$0x75316420]
        %1886 = vrot.lane.b32.xlu0 %v1883, 127
        %v1887 = vpop.permute.xlu0 %1886
        %1888 = vrot.lane.b32.xlu0 %v1884, 127
        %v1889 = vpop.permute.xlu0 %1888
        %1890 = vrot.lane.b32.xlu0 %v1885, 127
        %v1891 = vpop.permute.xlu0 %1890
        %v1892 = vsel %vm692, %v1887, %v1889
        %v1893 = vsel %vm692, %v1889, %v1891
        %v1895 = vsel %vm994, %v1879, 0
        %v1897 = vsel %vm953, %v1892, 0
        %v1899 = vsel %vm953, %v1893, 0
        %1901 = vmatpush.msra.mxu0 0.0
        %1902 = vmatpush.msra.mxu0 0.0
        %1903 = vmatpush.msra.mxu0 0.0
        %1904 = vmatpush.msra.mxu0 0.0
        %1905 = vmatpush.msra.mxu0 0.0
        %1906 = vmatpush.msra.mxu0 0.0
        %1907 = vmatpush.msra.mxu0 0.0
        %1908 = vmatpush.msra.mxu0 0.0
        %1909 = vmatpush.msra.mxu0 0.0
        %1910 = vmatpush.msra.mxu0 0.0
        %1911 = vmatpush.msra.mxu0 0.0
        %1912 = vmatpush.msra.mxu0 0.0
        %1913 = vmatpush.msra.mxu0 0.0
        %1914 = vmatpush.msra.mxu0 0.0
        %1915 = vmatpush.msra.mxu0 0.0
        %1916 = vmatpush.msra.mxu0 %v1897
        %1917 = vmatmul.f32.gmra.mxu0 %v1895
        %v1918 = vpop.f32.mrf.mxu0
        %v1919 = vadd.f32 0.0, %v1918
        %1920 = vdwg.mxu0
        %1921 = vmatpush.msra.mxu0 0.0
        %1922 = vmatpush.msra.mxu0 0.0
        %1923 = vmatpush.msra.mxu0 0.0
        %1924 = vmatpush.msra.mxu0 0.0
        %1925 = vmatpush.msra.mxu0 0.0
        %1926 = vmatpush.msra.mxu0 0.0
        %1927 = vmatpush.msra.mxu0 0.0
        %1928 = vmatpush.msra.mxu0 0.0
        %1929 = vmatpush.msra.mxu0 0.0
        %1930 = vmatpush.msra.mxu0 0.0
        %1931 = vmatpush.msra.mxu0 0.0
        %1932 = vmatpush.msra.mxu0 0.0
        %1933 = vmatpush.msra.mxu0 0.0
        %1934 = vmatpush.msra.mxu0 0.0
        %1935 = vmatpush.msra.mxu0 0.0
        %1936 = vmatpush.msra.mxu0 %v1899
        %1937 = vmatmul.f32.gmra.mxu0 %v1895
        %v1938 = vpop.f32.mrf.mxu0
        %v1939 = vadd.f32 0.0, %v1938
        %1940 = vdwg.mxu0
        %v1941 = vadd.f32 %v1876, %v1919
        %v1942 = vadd.f32 %v1877, %v1939
        %s1943 = scalar_lea.vmem %s6, 12
        %v1944 = vld [vmem:[%s1943] sm:$0x3]
        %1945 = vst [vmem:[#allocation1] ss:$2 sm:$0xff] %v1557
        %s1946 = scalar_lea.vmem [#allocation1], 16
        %1947 = vst [vmem:[%s1946] ss:$2 sm:$0xff] %v1558
        %v1948 = vld.sshfl [vmem:[#allocation1 + $0x8] sm:$0xff pattern:$0x75316420]
        %v1949 = vld.sshfl [vmem:[#allocation1 + $0x10] sm:$0xff pattern:$0x75316420]
        %v1950 = vld.sshfl [vmem:[#allocation1 + $0x18] sm:$0xff pattern:$0x75316420]
        %1951 = vrot.lane.b32.xlu0 %v1948, 113
        %v1952 = vpop.permute.xlu0 %1951
        %1953 = vrot.lane.b32.xlu0 %v1949, 113
        %v1954 = vpop.permute.xlu0 %1953
        %1955 = vrot.lane.b32.xlu0 %v1950, 113
        %v1956 = vpop.permute.xlu0 %1955
        %v1957 = vsel %vm348, %v1952, %v1954
        %v1958 = vsel %vm348, %v1954, %v1956
        %v1960 = vsel %vm994, %v1944, 0
        %v1962 = vsel %vm953, %v1957, 0
        %v1964 = vsel %vm953, %v1958, 0
        %1966 = vmatpush.msra.mxu0 0.0
        %1967 = vmatpush.msra.mxu0 0.0
        %1968 = vmatpush.msra.mxu0 0.0
        %1969 = vmatpush.msra.mxu0 0.0
        %1970 = vmatpush.msra.mxu0 0.0
        %1971 = vmatpush.msra.mxu0 0.0
        %1972 = vmatpush.msra.mxu0 0.0
        %1973 = vmatpush.msra.mxu0 0.0
        %1974 = vmatpush.msra.mxu0 0.0
        %1975 = vmatpush.msra.mxu0 0.0
        %1976 = vmatpush.msra.mxu0 0.0
        %1977 = vmatpush.msra.mxu0 0.0
        %1978 = vmatpush.msra.mxu0 0.0
        %1979 = vmatpush.msra.mxu0 0.0
        %1980 = vmatpush.msra.mxu0 0.0
        %1981 = vmatpush.msra.mxu0 %v1962
        %1982 = vmatmul.f32.gmra.mxu0 %v1960
        %v1983 = vpop.f32.mrf.mxu0
        %v1984 = vadd.f32 0.0, %v1983
        %1985 = vdwg.mxu0
        %1986 = vmatpush.msra.mxu0 0.0
        %1987 = vmatpush.msra.mxu0 0.0
        %1988 = vmatpush.msra.mxu0 0.0
        %1989 = vmatpush.msra.mxu0 0.0
        %1990 = vmatpush.msra.mxu0 0.0
        %1991 = vmatpush.msra.mxu0 0.0
        %1992 = vmatpush.msra.mxu0 0.0
        %1993 = vmatpush.msra.mxu0 0.0
        %1994 = vmatpush.msra.mxu0 0.0
        %1995 = vmatpush.msra.mxu0 0.0
        %1996 = vmatpush.msra.mxu0 0.0
        %1997 = vmatpush.msra.mxu0 0.0
        %1998 = vmatpush.msra.mxu0 0.0
        %1999 = vmatpush.msra.mxu0 0.0
        %2000 = vmatpush.msra.mxu0 0.0
        %2001 = vmatpush.msra.mxu0 %v1964
        %2002 = vmatmul.f32.gmra.mxu0 %v1960
        %v2003 = vpop.f32.mrf.mxu0
        %v2004 = vadd.f32 0.0, %v2003
        %2005 = vdwg.mxu0
        %v2006 = vadd.f32 %v1941, %v1984
        %v2007 = vadd.f32 %v1942, %v2004
        %s2008 = scalar_lea.vmem %s6, 14
        %v2009 = vld [vmem:[%s2008] sm:$0x3]
        %2010 = vst [vmem:[#allocation1] ss:$2 sm:$0xff] %v1555
        %s2011 = scalar_lea.vmem [#allocation1], 16
        %2012 = vst [vmem:[%s2011] ss:$2 sm:$0xff] %v1556
        %v2013 = vld.sshfl [vmem:[#allocation1 + $0x8] sm:$0xff pattern:$0x75316420]
        %v2014 = vld.sshfl [vmem:[#allocation1 + $0x10] sm:$0xff pattern:$0x75316420]
        %v2015 = vld.sshfl [vmem:[#allocation1 + $0x18] sm:$0xff pattern:$0x75316420]
        %2016 = vrot.lane.b32.xlu0 %v2013, 112
        %v2017 = vpop.permute.xlu0 %2016
        %2018 = vrot.lane.b32.xlu0 %v2014, 112
        %v2019 = vpop.permute.xlu0 %2018
        %2020 = vrot.lane.b32.xlu0 %v2015, 112
        %v2021 = vpop.permute.xlu0 %2020
        %v2022 = vsel %vm823, %v2017, %v2019
        %v2023 = vsel %vm823, %v2019, %v2021
        %v2025 = vsel %vm994, %v2009, 0
        %v2027 = vsel %vm953, %v2022, 0
        %v2029 = vsel %vm953, %v2023, 0
        %2031 = vmatpush.msra.mxu0 0.0
        %2032 = vmatpush.msra.mxu0 0.0
        %2033 = vmatpush.msra.mxu0 0.0
        %2034 = vmatpush.msra.mxu0 0.0
        %2035 = vmatpush.msra.mxu0 0.0
        %2036 = vmatpush.msra.mxu0 0.0
        %2037 = vmatpush.msra.mxu0 0.0
        %2038 = vmatpush.msra.mxu0 0.0
        %2039 = vmatpush.msra.mxu0 0.0
        %2040 = vmatpush.msra.mxu0 0.0
        %2041 = vmatpush.msra.mxu0 0.0
        %2042 = vmatpush.msra.mxu0 0.0
        %2043 = vmatpush.msra.mxu0 0.0
        %2044 = vmatpush.msra.mxu0 0.0
        %2045 = vmatpush.msra.mxu0 0.0
        %2046 = vmatpush.msra.mxu0 %v2027
        %2047 = vmatmul.f32.gmra.mxu0 %v2025
        %v2048 = vpop.f32.mrf.mxu0
        %v2049 = vadd.f32 0.0, %v2048
        %2050 = vdwg.mxu0
        %2051 = vmatpush.msra.mxu0 0.0
        %2052 = vmatpush.msra.mxu0 0.0
        %2053 = vmatpush.msra.mxu0 0.0
        %2054 = vmatpush.msra.mxu0 0.0
        %2055 = vmatpush.msra.mxu0 0.0
        %2056 = vmatpush.msra.mxu0 0.0
        %2057 = vmatpush.msra.mxu0 0.0
        %2058 = vmatpush.msra.mxu0 0.0
        %2059 = vmatpush.msra.mxu0 0.0
        %2060 = vmatpush.msra.mxu0 0.0
        %2061 = vmatpush.msra.mxu0 0.0
        %2062 = vmatpush.msra.mxu0 0.0
        %2063 = vmatpush.msra.mxu0 0.0
        %2064 = vmatpush.msra.mxu0 0.0
        %2065 = vmatpush.msra.mxu0 0.0
        %2066 = vmatpush.msra.mxu0 %v2029
        %2067 = vmatmul.f32.gmra.mxu0 %v2025
        %v2068 = vpop.f32.mrf.mxu0
        %v2069 = vadd.f32 0.0, %v2068
        %2070 = vdwg.mxu0
        %v2071 = vadd.f32 %v2006, %v2049
        %v2072 = vadd.f32 %v2007, %v2069
        %s2073 = scalar_lea.vmem %s6, 16
        %v2074 = vld [vmem:[%s2073] sm:$0x3]
        %2075 = vst [vmem:[#allocation1] ss:$2 sm:$0xff] %v1559
        %s2076 = scalar_lea.vmem [#allocation1], 16
        %2077 = vst [vmem:[%s2076] ss:$2 sm:$0xff] %v1560
        %v2078 = vld.sshfl [vmem:[#allocation1 + $0x8] sm:$0xff pattern:$0x75316420]
        %v2079 = vld.sshfl [vmem:[#allocation1 + $0x10] sm:$0xff pattern:$0x75316420]
        %v2080 = vld.sshfl [vmem:[#allocation1 + $0x18] sm:$0xff pattern:$0x75316420]
        %2081 = vrot.lane.b32.xlu0 %v2078, 111
        %v2082 = vpop.permute.xlu0 %2081
        %2083 = vrot.lane.b32.xlu0 %v2079, 111
        %v2084 = vpop.permute.xlu0 %2083
        %2085 = vrot.lane.b32.xlu0 %v2080, 111
        %v2086 = vpop.permute.xlu0 %2085
        %v2087 = vsel %vm328, %v2082, %v2084
        %v2088 = vsel %vm328, %v2084, %v2086
        %v2090 = vsel %vm994, %v2074, 0
        %v2092 = vsel %vm953, %v2087, 0
        %v2094 = vsel %vm953, %v2088, 0
        %2096 = vmatpush.msra.mxu0 0.0
        %2097 = vmatpush.msra.mxu0 0.0
        %2098 = vmatpush.msra.mxu0 0.0
        %2099 = vmatpush.msra.mxu0 0.0
        %2100 = vmatpush.msra.mxu0 0.0
        %2101 = vmatpush.msra.mxu0 0.0
        %2102 = vmatpush.msra.mxu0 0.0
        %2103 = vmatpush.msra.mxu0 0.0
        %2104 = vmatpush.msra.mxu0 0.0
        %2105 = vmatpush.msra.mxu0 0.0
        %2106 = vmatpush.msra.mxu0 0.0
        %2107 = vmatpush.msra.mxu0 0.0
        %2108 = vmatpush.msra.mxu0 0.0
        %2109 = vmatpush.msra.mxu0 0.0
        %2110 = vmatpush.msra.mxu0 0.0
        %2111 = vmatpush.msra.mxu0 %v2092
        %2112 = vmatmul.f32.gmra.mxu0 %v2090
        %v2113 = vpop.f32.mrf.mxu0
        %v2114 = vadd.f32 0.0, %v2113
        %2115 = vdwg.mxu0
        %2116 = vmatpush.msra.mxu0 0.0
        %2117 = vmatpush.msra.mxu0 0.0
        %2118 = vmatpush.msra.mxu0 0.0
        %2119 = vmatpush.msra.mxu0 0.0
        %2120 = vmatpush.msra.mxu0 0.0
        %2121 = vmatpush.msra.mxu0 0.0
        %2122 = vmatpush.msra.mxu0 0.0
        %2123 = vmatpush.msra.mxu0 0.0
        %2124 = vmatpush.msra.mxu0 0.0
        %2125 = vmatpush.msra.mxu0 0.0
        %2126 = vmatpush.msra.mxu0 0.0
        %2127 = vmatpush.msra.mxu0 0.0
        %2128 = vmatpush.msra.mxu0 0.0
        %2129 = vmatpush.msra.mxu0 0.0
        %2130 = vmatpush.msra.mxu0 0.0
        %2131 = vmatpush.msra.mxu0 %v2094
        %2132 = vmatmul.f32.gmra.mxu0 %v2090
        %v2133 = vpop.f32.mrf.mxu0
        %v2134 = vadd.f32 0.0, %v2133
        %2135 = vdwg.mxu0
        %v2136 = vadd.f32 %v2071, %v2114
        %v2137 = vadd.f32 %v2072, %v2134
        %v2138 = vld [vmem:[%s7] sm:$0x3]
        %2140 = vset.pattern.permute.xlu0 0
        %2141 = vperm.xlu0 %2140, %v2138
        %v2142 = vpop.permute.xlu0 %2141
        %v2144 = vadd.f32 %v2136, %v2142
        %v2145 = vadd.f32 %v2137, %v2142
        %v2146 = vmax.f32 %v2144, 0.0
        %v2147 = vmax.f32 %v2145, 0.0
        %v2150 = vrot.slane %v2147, 4
        %v2151 = vsel %vm320, %v2146, %v2150
        %v2152 = vrot.slane %v2151, 6
        %2154 = vst [vmem:[%s298] sm:$0xcc] %v2152
        %s2155 = sand.u32 %s203, 1
        %s2156 = scalar_lea.sflag [#allocation5], %s2155
        %s2157 = sand.u32 %s203, 1
        %s2158 = smul.addr %s2157, 8
        %s2159 = scalar_lea.vmem [#allocation4], %s2158
        // Predicated region
        $region53: #{tpu_custom_call.1} parent=51 // pred_check
          %p2160 = pneg %p213
        $region54: #{tpu_custom_call.1} parent=51 // pred_check_branch
          %2162 = sbr.rel (%p2160) target = $region56
        $region55: #{tpu_custom_call.1} parent=51 // pred_region
          %2164 = vsyncadd %s2156, 0
          %s2165 = smul.addr %s22, 2
          %s2166 = smul.addr %s2165, 4
          %s2167 = scalar_lea.hbm %s8, %s2166
          %s2169 = sshll.u32 %s2159, 4
          %s2170 = int_to_ptr.vmem [resolvable:$true] %s2169
          %s2171 = sshll.u32 %s2167, 4
          %s2172 = int_to_ptr.hbm [resolvable:$true] %s2171
          %2174 = dma.vmem_to_hbm [thread:$0]  %s2170, 128, %s2172, %s2156
        $region56: #{tpu_custom_call.1} parent=51 // pred_fallthru
          _
      $region52: #{tpu_custom_call.1} parent=5 // pred_fallthru
        _
      %p2175 = scmp.le.s32.totalorder 2, %s17
      // Predicated region
      $region57: #{tpu_custom_call.1} parent=5 // pred_check
        %p2176 = pneg %p2175
      $region58: #{tpu_custom_call.1} parent=5 // pred_check_branch
        %2178 = sbr.rel (%p2176) target = $region60
      $region59: #{tpu_custom_call.1} parent=5 // pred_region
        %s2179 = ssub.s32 %s17, 2
        // Predicated region
        $region61: #{tpu_custom_call.1} parent=59 // pred_check
          %p2180 = pneg %p219
        $region62: #{tpu_custom_call.1} parent=59 // pred_check_branch
          %2182 = sbr.rel (%p2180) target = $region64
        $region63: #{tpu_custom_call.1} parent=59 // pred_region
          %s2183 = sand.u32 %s204, 1
          %s2184 = scalar_lea.sflag [#allocation5], %s2183
          %s2185 = sand.u32 %s204, 1
          %s2186 = smul.addr %s2185, 8
          %s2187 = scalar_lea.vmem [#allocation4], %s2186
          %2189 = dma.done %s2184, 128
        $region64: #{tpu_custom_call.1} parent=59 // pred_fallthru
          _
      $region60: #{tpu_custom_call.1} parent=5 // pred_fallthru
        _
    $region6: #{tpu_custom_call.1} parent=1 // loop_footer
      %s21 = sadd.s32 1, %s17
    $region7: #{tpu_custom_call.1} parent=1 // loop_footer_branch
      %16 = sbr.rel target = $region3
    $region8: #{tpu_custom_call.1} parent=1 // loop_exit
      _
    %2190 = vsyncpa [#allocation5], 1
    %s2191 = scalar_lea.sflag [#allocation5], 1
    %2192 = vsyncpa %s2191, 1

</llo_original>
